<compile_context>
chip_gen: v7x
topology: tpu7x:2x2x1
jax: 0.10.0
libtpu: 0.0.40
codegen_flags: <defaults>
</compile_context>

<pallas_src>
import functools

import jax
import jax.numpy as jnp
from jax import lax
from jax.experimental import pallas as pl
from jax.experimental.pallas import tpu as pltpu


def _round_up(x, m):
    return (x + m - 1) // m * m


def _vmem_budget_bytes():
    """~75% of this generation's per-core VMEM (64 MiB on v7x, 128 MiB on v5e/v6e)."""
    default = 48 * 1024 * 1024
    try:
        info = pltpu.get_tpu_info()
        cap = getattr(info, "vmem_capacity_bytes", None)
        return int(cap * 3 // 4) if cap else default
    except Exception:
        return default


def _attention_kernel(x_mm_ref, x_res_ref, wq_ref, bq_ref, wkv_ref, bkv_ref,
                      o_ref, k_ref, v_ref, *,
                      c, cpad, q_tile, batch_block, n_valid, n_pad, dot_dtype):
    # Per-grid-step block shapes:
    #   x_mm_ref : (batch_block, C, Npad)      dot_dtype  resident across the q axis
    #   x_res_ref: (batch_block, C, q_tile)    f32        residual tile
    #   wq_ref   : (cpad, C) dot_dtype         bq_ref : (cpad, 1) f32   (zero-padded rows)
    #   wkv_ref  : (cpad + C, C) dot_dtype     rows [0:cpad] = Wk (padded), [cpad:] = Wv
    #   bkv_ref  : (cpad + C, 1) f32
    #   o_ref    : (batch_block, C, q_tile)    f32
    #   k_ref    : (batch_block, cpad, Npad)   dot_dtype  VMEM scratch (cached K)
    #   v_ref    : (batch_block, C, Npad)      dot_dtype  VMEM scratch (cached V)
    qt = pl.program_id(1)

    # Once per batch block (the q grid axis is "arbitrary"): fused K|V projection into
    # VMEM scratch. Bias adds happen here, so they are not repeated per query tile.
    @pl.when(qt == 0)
    def _project_kv():
        wkv = wkv_ref[...]
        bkv = bkv_ref[...]
        for bb in range(batch_block):  # batch_block <= 2: bounded live ranges
            kv = jnp.dot(wkv, x_mm_ref[bb],
                         preferred_element_type=jnp.float32) + bkv   # (cpad + C, Npad) f32
            k_ref[bb] = kv[:cpad].astype(dot_dtype)
            v_ref[bb] = kv[cpad:].astype(dot_dtype)

    qs = pl.multiple_of(qt * q_tile, q_tile)
    wq = wq_ref[...]
    bq = bq_ref[...]

    for bb in range(batch_block):
        k = k_ref[bb]                                   # (cpad, Npad) dot_dtype (cached)
        v = v_ref[bb]                                   # (C,    Npad) dot_dtype (cached)
        x_q = x_mm_ref[bb, :, pl.ds(qs, q_tile)]        # (C, Tq) dot_dtype

        # Q projection only for this query tile (tiny matmul, f32 accumulation).
        q = jnp.dot(wq, x_q, preferred_element_type=jnp.float32) + bq   # (cpad, Tq) f32

        # scores[t, m] = <q[:, t], k[:, m]>; bf16 MXU operands, f32 accumulation.
        # (padded q / k rows are exactly zero, so they add nothing.)
        s = jnp.dot(q.T.astype(dot_dtype), k,
                    preferred_element_type=jnp.float32)                 # (Tq, Npad) f32

        if n_valid < n_pad:  # spatial axis was padded to a lane-dense multiple of 128
            key_idx = lax.broadcasted_iota(jnp.int32, (q_tile, n_pad), 1)
            s = jnp.where(key_idx < n_valid, s, -1e30)

        # Softmax over keys (f32); approximate reciprocal runs on the EUP slot.
        s = s - jnp.max(s, axis=-1, keepdims=True)
        p = jnp.exp(s)
        p = p * pl.reciprocal(jnp.sum(p, axis=-1, keepdims=True), approx=True)

        # out[c, t] = sum_m v[c, m] * p[t, m]  (transposed-RHS matmul, f32 accumulation).
        out = lax.dot_general(v, p.astype(dot_dtype), (((1,), (1,)), ((), ())),
                              preferred_element_type=jnp.float32)       # (C, Tq)

        # Exact f32 residual from the f32 tile, lane-dense store.
        o_ref[bb] = (out + x_res_ref[bb]).astype(o_ref.dtype)


def attention_layer_pallas(x_nchw, wq, bq, wk, bk, wv, bv, *,
                           dot_dtype=jnp.bfloat16, q_tile=None, batch_block=None):
    """x_nchw: (B, C, W, H) f32.  wq/wk: (C//8, C), wv: (C, C), biases: (Cout,)."""
    B, C, W, H = x_nchw.shape
    assert C >= 8, "AttentionLayer needs in_channels >= 8"
    N = W * H
    C8 = wq.shape[0]
    cpad = _round_up(C8, 8)
    dot_bytes = jnp.dtype(dot_dtype).itemsize

    # NCHW -> (B, C, N) is a pure reshape; pad the spatial axis to a lane-dense multiple
    # of 128 (padded keys are masked to -inf in-kernel, padded queries sliced off here).
    n_pad = max(_round_up(N, 128), 128)
    x_bcn = x_nchw.reshape(B, C, N)
    if n_pad != N:
        x_bcn = jnp.pad(x_bcn, ((0, 0), (0, 0), (0, n_pad - N)))

    # bf16 copy feeds all matmuls (half the resident footprint, no in-kernel x cast);
    # the f32 original is fetched only per query tile for the exact residual add.
    x_mm = x_bcn.astype(dot_dtype)

    # Fused, sublane-aligned K|V weight & bias; Wq/bq zero-padded to cpad rows so every
    # scratch slice stays 8-row aligned. Operands are pre-cast once in the wrapper.
    wkv = jnp.zeros((cpad + C, C), dtype=dot_dtype)
    wkv = wkv.at[:C8].set(wk.astype(dot_dtype)).at[cpad:].set(wv.astype(dot_dtype))
    bkv = jnp.zeros((cpad + C, 1), dtype=jnp.float32)
    bkv = bkv.at[:C8].set(bk.reshape(-1, 1).astype(jnp.float32))
    bkv = bkv.at[cpad:].set(bv.reshape(-1, 1).astype(jnp.float32))
    wq_p = jnp.zeros((cpad, C), dtype=dot_dtype).at[:C8].set(wq.astype(dot_dtype))
    bq_p = jnp.zeros((cpad, 1), dtype=jnp.float32).at[:C8].set(
        bq.reshape(-1, 1).astype(jnp.float32))

    vmem_limit = _vmem_budget_bytes()
    fit_budget = int(vmem_limit * 0.8)

    # Query-tile size: output minor dim is a multiple of 128 (unmasked stores), prefer
    # 512/256 multiples for the 256-wide MXU on v6e/v7x.
    if q_tile is None:
        if n_pad <= 512:
            q_tile = n_pad
        else:
            q_tile = next((t for t in (512, 256) if n_pad % t == 0), n_pad)
    assert n_pad % q_tile == 0

    # Batch elements per grid step: keep >= 2 blocks on the "parallel" batch axis so both
    # v7x TensorCores get work; cap at 2 so the static unroll keeps live ranges bounded.
    if batch_block is None:
        batch_block = 2 if (B % 2 == 0 and B // 2 >= 2) else 1
    assert B % batch_block == 0

    def _vmem_estimate(bb, qt):
        return (2 * bb * C * n_pad * dot_bytes          # resident x (double-buffered)
                + 2 * bb * C * qt * 4                   # f32 residual tile
                + 2 * bb * C * qt * 4                   # output tile
                + bb * (cpad + C) * n_pad * dot_bytes   # cached K|V scratch
                + 3 * qt * n_pad * 4                    # live (Tq, Npad) score temporaries
                + 2 * (2 * cpad + 2 * C) * C * dot_bytes)  # weights

    while batch_block > 1 and _vmem_estimate(batch_block, q_tile) > fit_budget:
        batch_block -= 1
        while B % batch_block:
            batch_block -= 1
    while (q_tile > 128 and n_pad % (q_tile // 2) == 0 and (q_tile // 2) % 128 == 0
           and _vmem_estimate(batch_block, q_tile) > fit_budget):
        q_tile //= 2
    # TODO(synk): if even q_tile=128 misses the VMEM budget (very large N, esp. on v7x),
    # add key tiling + online (flash) softmax so the live score tile becomes (Tq, Tk).
    assert B % batch_block == 0 and n_pad % q_tile == 0

    grid = (B // batch_block, n_pad // q_tile)

    kernel = functools.partial(
        _attention_kernel, c=C, cpad=cpad, q_tile=q_tile, batch_block=batch_block,
        n_valid=N, n_pad=n_pad, dot_dtype=dot_dtype)

    full = lambda shape: pl.BlockSpec(shape, lambda b, q: (0,) * len(shape))

    out_bcn = pl.pallas_call(
        kernel,
        out_shape=jax.ShapeDtypeStruct((B, C, n_pad), x_nchw.dtype),
        grid_spec=pltpu.PrefetchScalarGridSpec(
            num_scalar_prefetch=0,
            grid=grid,
            in_specs=[
                pl.BlockSpec((batch_block, C, n_pad), lambda b, q: (b, 0, 0)),   # x (matmul copy)
                pl.BlockSpec((batch_block, C, q_tile), lambda b, q: (b, 0, q)),  # x (residual tile)
                full((cpad, C)),          # Wq (padded rows)
                full((cpad, 1)),          # bq
                full((cpad + C, C)),      # fused Wk | Wv
                full((cpad + C, 1)),      # fused bk | bv
            ],
            out_specs=pl.BlockSpec((batch_block, C, q_tile), lambda b, q: (b, 0, q)),
            scratch_shapes=[
                pltpu.VMEM((batch_block, cpad, n_pad), dot_dtype),   # cached K
                pltpu.VMEM((batch_block, C, n_pad), dot_dtype),      # cached V
            ],
        ),
        compiler_params=pltpu.CompilerParams(
            dimension_semantics=("parallel", "arbitrary"),
            vmem_limit_bytes=vmem_limit,
        ),
    )(x_mm, x_bcn, wq_p, bq_p, wkv, bkv)

    if n_pad != N:
        out_bcn = out_bcn[:, :, :N]
    return out_bcn.reshape(B, C, W, H)


def _reference(x_nchw, wq, bq, wk, bk, wv, bv):
    """Pure-JAX reference mirroring the PyTorch forward."""
    B, C, W, H = x_nchw.shape
    N = W * H
    xf = x_nchw.reshape(B, C, N)
    q = jnp.einsum("oc,bcn->bon", wq, xf) + bq.reshape(1, -1, 1)
    k = jnp.einsum("oc,bcn->bon", wk, xf) + bk.reshape(1, -1, 1)
    v = jnp.einsum("oc,bcn->bon", wv, xf) + bv.reshape(1, -1, 1)
    attn = jax.nn.softmax(jnp.einsum("bcn,bcm->bnm", q, k), axis=-1)
    out = jnp.einsum("bcm,bnm->bcn", v, attn)
    return out.reshape(B, C, W, H) + x_nchw


if __name__ == "__main__":
    B, C, W, H = 2, 32, 16, 16          # N = 256
    C8 = C // 8

    key = jax.random.PRNGKey(0)
    kx, kq, kk, kv_, kbq, kbk, kbv, kx2 = jax.random.split(key, 8)

    x = jax.random.normal(kx, (B, C, W, H), dtype=jnp.float32)
    wq = jax.random.normal(kq, (C8, C), dtype=jnp.float32) * 0.1
    wk = jax.random.normal(kk, (C8, C), dtype=jnp.float32) * 0.1
    wv = jax.random.normal(kv_, (C, C), dtype=jnp.float32) * 0.1
    bq = jax.random.normal(kbq, (C8,), dtype=jnp.float32) * 0.1
    bk = jax.random.normal(kbk, (C8,), dtype=jnp.float32) * 0.1
    bv = jax.random.normal(kbv, (C,), dtype=jnp.float32) * 0.1

    ref = _reference(x, wq, bq, wk, bk, wv, bv)

    # 1) Recommended config (bf16 MXU operands, auto tiling).
    out_bf16 = jax.block_until_ready(attention_layer_pallas(x, wq, bq, wk, bk, wv, bv))
    assert out_bf16.shape == x.shape
    assert jnp.allclose(out_bf16, ref, atol=5e-2, rtol=5e-2), "bf16 mismatch vs reference"

    # 2) bf16 with forced query tiling: exercises the per-batch-block K|V cache being
    #    reused across multiple q-tile grid steps ("arbitrary" q axis).
    out_tiled = jax.block_until_ready(
        attention_layer_pallas(x, wq, bq, wk, bk, wv, bv, q_tile=128, batch_block=1))
    assert jnp.allclose(out_tiled, ref, atol=5e-2, rtol=5e-2), "tiled bf16 mismatch"

    # 3) f32 matmul-operand path with query tiling.
    out_f32 = jax.block_until_ready(
        attention_layer_pallas(x, wq, bq, wk, bk, wv, bv,
                               dot_dtype=jnp.float32, q_tile=128, batch_block=1))
    assert jnp.allclose(out_f32, ref, atol=1e-2, rtol=1e-2), "f32 mismatch vs reference"

    # 4) Non-128-multiple spatial size: exercises the lane padding + key masking path.
    x_small = jax.random.normal(kx2, (B, C, 10, 10), dtype=jnp.float32)   # N = 100 -> 128
    ref_small = _reference(x_small, wq, bq, wk, bk, wv, bv)
    out_small = jax.block_until_ready(
        attention_layer_pallas(x_small, wq, bq, wk, bk, wv, bv))
    assert out_small.shape == x_small.shape
    assert jnp.allclose(out_small, ref_small, atol=5e-2, rtol=5e-2), "padded-N mismatch"

    print("KERNEL_OK")
</pallas_src>

<mosaic_0001>
module attributes {stable_mosaic.version = 11 : i64} {
  func.func @_attention_kernel(%arg0: i32, %arg1: i32, %arg2: memref<1x32x256xbf16, #tpu.memory_space<vmem>>, %arg3: memref<1x32x256xf32, #tpu.memory_space<vmem>>, %arg4: memref<8x32xbf16, #tpu.memory_space<vmem>>, %arg5: memref<8x1xf32, #tpu.memory_space<vmem>>, %arg6: memref<40x32xbf16, #tpu.memory_space<vmem>>, %arg7: memref<40x1xf32, #tpu.memory_space<vmem>>, %arg8: memref<1x32x256xf32, #tpu.memory_space<vmem>>, %arg9: memref<1x8x256xbf16, #tpu.memory_space<vmem>>, %arg10: memref<1x32x256xbf16, #tpu.memory_space<vmem>>) attributes {dimension_semantics = [#tpu.dimension_semantics<parallel>, #tpu.dimension_semantics<arbitrary>], iteration_bounds = array<i64: 2, 1>, scalar_prefetch = 0 : i64, scratch_operands = 2 : i64, tpu.core_type = #tpu.core_type<tc>, window_params = [{transform_indices = @transform_0, window_bounds = array<i64: 1, 32, 256>}, {transform_indices = @transform_1, window_bounds = array<i64: 1, 32, 256>}, {pipeline_mode = #tpu.pipeline_mode<synchronous>, transform_indices = @transform_2, window_bounds = array<i64: 8, 32>}, {pipeline_mode = #tpu.pipeline_mode<synchronous>, transform_indices = @transform_3, window_bounds = array<i64: 8, 1>}, {pipeline_mode = #tpu.pipeline_mode<synchronous>, transform_indices = @transform_4, window_bounds = array<i64: 40, 32>}, {pipeline_mode = #tpu.pipeline_mode<synchronous>, transform_indices = @transform_5, window_bounds = array<i64: 40, 1>}, {transform_indices = @transform_6, window_bounds = array<i64: 1, 32, 256>}]} {
    %c0_i32 = arith.constant 0 : i32
    %0 = arith.cmpi eq, %arg1, %c0_i32 : i32
    %1 = arith.extui %0 : i1 to i32
    %c0_i32_0 = arith.constant 0 : i32
    %2 = arith.cmpi ne, %1, %c0_i32_0 : i32
    scf.if %2 {
      %c0_22 = arith.constant 0 : index
      %c0_23 = arith.constant 0 : index
      %38 = vector.load %arg6[%c0_22, %c0_23] : memref<40x32xbf16, #tpu.memory_space<vmem>>, vector<40x32xbf16>
      %c0_24 = arith.constant 0 : index
      %c0_25 = arith.constant 0 : index
      %39 = vector.load %arg7[%c0_24, %c0_25] : memref<40x1xf32, #tpu.memory_space<vmem>>, vector<40x1xf32>
      %c0_26 = arith.constant 0 : index
      %c0_27 = arith.constant 0 : index
      %c0_28 = arith.constant 0 : index
      %40 = vector.load %arg2[%c0_26, %c0_27, %c0_28] : memref<1x32x256xbf16, #tpu.memory_space<vmem>>, vector<1x32x256xbf16>
      %41 = vector.shape_cast %40 : vector<1x32x256xbf16> to vector<32x256xbf16>
      %cst_29 = arith.constant dense<0.000000e+00> : vector<40x256xf32>
      %42 = tpu.matmul %38, %41, %cst_29 {dimension_numbers = #tpu.dot_dimension_numbers<[1], [0], [0], [1], [0, 0, 1, 1], [], []>} : vector<40x32xbf16>, vector<32x256xbf16>, vector<40x256xf32> -> vector<40x256xf32>
      %43 = vector.broadcast %39 : vector<40x1xf32> to vector<40x256xf32>
      %44 = arith.addf %42, %43 : vector<40x256xf32>
      %45 = vector.extract_strided_slice %44 {offsets = [0, 0], sizes = [8, 256], strides = [1, 1]} : vector<40x256xf32> to vector<8x256xf32>
      %46 = arith.truncf %45 : vector<8x256xf32> to vector<8x256xbf16>
      %c0_30 = arith.constant 0 : index
      %c0_31 = arith.constant 0 : index
      %c0_32 = arith.constant 0 : index
      %47 = vector.load %arg9[%c0_30, %c0_31, %c0_32] : memref<1x8x256xbf16, #tpu.memory_space<vmem>>, vector<1x8x256xbf16>
      %48 = vector.shape_cast %47 : vector<1x8x256xbf16> to vector<8x256xbf16>
      %49 = vector.shape_cast %46 : vector<8x256xbf16> to vector<1x8x256xbf16>
      tpu.vector_store %arg9[%c0_30, %c0_31, %c0_32], %49 {strides = array<i32>} : memref<1x8x256xbf16, #tpu.memory_space<vmem>>, vector<1x8x256xbf16>,
      %50 = vector.extract_strided_slice %44 {offsets = [8, 0], sizes = [32, 256], strides = [1, 1]} : vector<40x256xf32> to vector<32x256xf32>
      %51 = arith.truncf %50 : vector<32x256xf32> to vector<32x256xbf16>
      %c0_33 = arith.constant 0 : index
      %c0_34 = arith.constant 0 : index
      %c0_35 = arith.constant 0 : index
      %52 = vector.load %arg10[%c0_33, %c0_34, %c0_35] : memref<1x32x256xbf16, #tpu.memory_space<vmem>>, vector<1x32x256xbf16>
      %53 = vector.shape_cast %52 : vector<1x32x256xbf16> to vector<32x256xbf16>
      %54 = vector.shape_cast %51 : vector<32x256xbf16> to vector<1x32x256xbf16>
      tpu.vector_store %arg10[%c0_33, %c0_34, %c0_35], %54 {strides = array<i32>} : memref<1x32x256xbf16, #tpu.memory_space<vmem>>, vector<1x32x256xbf16>,
    } else {
    }
    %c256_i32 = arith.constant 256 : i32
    %3 = arith.muli %arg1, %c256_i32 : i32
    %4 = tpu.assume_multiple %3, 256 : i32
    %c0 = arith.constant 0 : index
    %c0_1 = arith.constant 0 : index
    %5 = vector.load %arg4[%c0, %c0_1] : memref<8x32xbf16, #tpu.memory_space<vmem>>, vector<8x32xbf16>
    %c0_2 = arith.constant 0 : index
    %c0_3 = arith.constant 0 : index
    %6 = vector.load %arg5[%c0_2, %c0_3] : memref<8x1xf32, #tpu.memory_space<vmem>>, vector<8x1xf32>
    %c0_4 = arith.constant 0 : index
    %c0_5 = arith.constant 0 : index
    %c0_6 = arith.constant 0 : index
    %7 = vector.load %arg9[%c0_4, %c0_5, %c0_6] : memref<1x8x256xbf16, #tpu.memory_space<vmem>>, vector<1x8x256xbf16>
    %8 = vector.shape_cast %7 : vector<1x8x256xbf16> to vector<8x256xbf16>
    %c0_7 = arith.constant 0 : index
    %c0_8 = arith.constant 0 : index
    %c0_9 = arith.constant 0 : index
    %9 = vector.load %arg10[%c0_7, %c0_8, %c0_9] : memref<1x32x256xbf16, #tpu.memory_space<vmem>>, vector<1x32x256xbf16>
    %10 = vector.shape_cast %9 : vector<1x32x256xbf16> to vector<32x256xbf16>
    %c0_10 = arith.constant 0 : index
    %c0_11 = arith.constant 0 : index
    %11 = arith.index_cast %4 : i32 to index
    %12 = vector.load %arg2[%c0_10, %c0_11, %11] : memref<1x32x256xbf16, #tpu.memory_space<vmem>>, vector<1x32x256xbf16>
    %13 = vector.shape_cast %12 : vector<1x32x256xbf16> to vector<32x256xbf16>
    %cst = arith.constant dense<0.000000e+00> : vector<8x256xf32>
    %14 = tpu.matmul %5, %13, %cst {dimension_numbers = #tpu.dot_dimension_numbers<[1], [0], [0], [1], [0, 0, 1, 1], [], []>} : vector<8x32xbf16>, vector<32x256xbf16>, vector<8x256xf32> -> vector<8x256xf32>
    %15 = vector.broadcast %6 : vector<8x1xf32> to vector<8x256xf32>
    %16 = arith.addf %14, %15 : vector<8x256xf32>
    %17 = tpu.transpose %16, [1, 0] : vector<8x256xf32> -> vector<256x8xf32>
    %18 = arith.truncf %17 : vector<256x8xf32> to vector<256x8xbf16>
    %cst_12 = arith.constant dense<0.000000e+00> : vector<256x256xf32>
    %19 = tpu.matmul %18, %8, %cst_12 {dimension_numbers = #tpu.dot_dimension_numbers<[1], [0], [0], [1], [0, 0, 1, 1], [], []>} : vector<256x8xbf16>, vector<8x256xbf16>, vector<256x256xf32> -> vector<256x256xf32>
    %cst_13 = arith.constant dense<0xFF800000> : vector<256xf32>
    %20 = vector.multi_reduction <maximumf>, %19, %cst_13 [1] : vector<256x256xf32> to vector<256xf32>
    %21 = vector.shape_cast %20 : vector<256xf32> to vector<256x1xf32>
    %22 = vector.broadcast %21 : vector<256x1xf32> to vector<256x256xf32>
    %23 = arith.subf %19, %22 : vector<256x256xf32>
    %24 = math.exp %23 : vector<256x256xf32>
    %cst_14 = arith.constant dense<0.000000e+00> : vector<256xf32>
    %25 = vector.multi_reduction <add>, %24, %cst_14 [1] : vector<256x256xf32> to vector<256xf32>
    %26 = vector.shape_cast %25 : vector<256xf32> to vector<256x1xf32>
    %27 = tpu.reciprocal %26 {approx = true} : vector<256x1xf32> -> vector<256x1xf32>
    %28 = vector.broadcast %27 : vector<256x1xf32> to vector<256x256xf32>
    %29 = arith.mulf %24, %28 : vector<256x256xf32>
    %30 = arith.truncf %29 : vector<256x256xf32> to vector<256x256xbf16>
    %cst_15 = arith.constant dense<0.000000e+00> : vector<32x256xf32>
    %31 = tpu.matmul %10, %30, %cst_15 {dimension_numbers = #tpu.dot_dimension_numbers<[1], [1], [0], [0], [0, 0, 1, 0], [], []>} : vector<32x256xbf16>, vector<256x256xbf16>, vector<32x256xf32> -> vector<32x256xf32>
    %c0_16 = arith.constant 0 : index
    %c0_17 = arith.constant 0 : index
    %c0_18 = arith.constant 0 : index
    %32 = vector.load %arg3[%c0_16, %c0_17, %c0_18] : memref<1x32x256xf32, #tpu.memory_space<vmem>>, vector<1x32x256xf32>
    %33 = vector.shape_cast %32 : vector<1x32x256xf32> to vector<32x256xf32>
    %34 = arith.addf %31, %33 : vector<32x256xf32>
    %c0_19 = arith.constant 0 : index
    %c0_20 = arith.constant 0 : index
    %c0_21 = arith.constant 0 : index
    %35 = vector.load %arg8[%c0_19, %c0_20, %c0_21] : memref<1x32x256xf32, #tpu.memory_space<vmem>>, vector<1x32x256xf32>
    %36 = vector.shape_cast %35 : vector<1x32x256xf32> to vector<32x256xf32>
    %37 = vector.shape_cast %34 : vector<32x256xf32> to vector<1x32x256xf32>
    tpu.vector_store %arg8[%c0_19, %c0_20, %c0_21], %37 {strides = array<i32>} : memref<1x32x256xf32, #tpu.memory_space<vmem>>, vector<1x32x256xf32>,
    return
  }
  func.func @transform_0(%arg0: i32, %arg1: i32) -> (i32, i32, i32) {
    %c0_i32 = arith.constant 0 : i32
    %c0_i32_0 = arith.constant 0 : i32
    %c0_i32_1 = arith.constant 0 : i32
    return %arg0, %c0_i32, %c0_i32_0 : i32, i32, i32
  }
  func.func @transform_1(%arg0: i32, %arg1: i32) -> (i32, i32, i32) {
    %c0_i32 = arith.constant 0 : i32
    %c0_i32_0 = arith.constant 0 : i32
    return %arg0, %c0_i32, %arg1 : i32, i32, i32
  }
  func.func @transform_2(%arg0: i32, %arg1: i32) -> (i32, i32) {
    %c0_i32 = arith.constant 0 : i32
    %c0_i32_0 = arith.constant 0 : i32
    %c0_i32_1 = arith.constant 0 : i32
    return %c0_i32, %c0_i32_0 : i32, i32
  }
  func.func @transform_3(%arg0: i32, %arg1: i32) -> (i32, i32) {
    %c0_i32 = arith.constant 0 : i32
    %c0_i32_0 = arith.constant 0 : i32
    %c0_i32_1 = arith.constant 0 : i32
    return %c0_i32, %c0_i32_0 : i32, i32
  }
  func.func @transform_4(%arg0: i32, %arg1: i32) -> (i32, i32) {
    %c0_i32 = arith.constant 0 : i32
    %c0_i32_0 = arith.constant 0 : i32
    %c0_i32_1 = arith.constant 0 : i32
    return %c0_i32, %c0_i32_0 : i32, i32
  }
  func.func @transform_5(%arg0: i32, %arg1: i32) -> (i32, i32) {
    %c0_i32 = arith.constant 0 : i32
    %c0_i32_0 = arith.constant 0 : i32
    %c0_i32_1 = arith.constant 0 : i32
    return %c0_i32, %c0_i32_0 : i32, i32
  }
  func.func @transform_6(%arg0: i32, %arg1: i32) -> (i32, i32, i32) {
    %c0_i32 = arith.constant 0 : i32
    %c0_i32_0 = arith.constant 0 : i32
    return %arg0, %c0_i32, %arg1 : i32, i32, i32
  }
}

</mosaic_0001>

<llo_original>
// kernel: tpu_custom_call.1
$region0: #{tpu_custom_call.1}
  #allocation0 [shape = 'u32[]', space=smem, size = 0x4, offset = 0x4, fixed_abs, tag = 'smem constant byte address 0x4 - core index']
  #allocation1 [shape = 'u32[144,128]{1,0:T(1,128)}', space=vmem, size = 0x12000, scoped, tag = 'internal scratch']
  #allocation2 [shape = 'bf16[1,8,256]{2,1,0:T(8,128)(2,1)}', space=vmem, size = 0x1000, scoped, tag = 'scratch operand']
  #allocation3 [shape = 'bf16[1,32,256]{2,1,0:T(16,128)(2,1)}', space=vmem, size = 0x4000, scoped, tag = 'scratch operand']
  %s0 = inlined_call_operand.vmem [shape: bf16[2,32,256], index: 0, kind: input, shape index: {}]
  %s1 = inlined_call_operand.hbm [shape: f32[2,32,256], index: 1, kind: input, shape index: {}]
  %s2 = inlined_call_operand.vmem [shape: bf16[8,32], index: 2, kind: input, shape index: {}]
  %s3 = inlined_call_operand.vmem [shape: f32[8,1], index: 3, kind: input, shape index: {}]
  %s4 = inlined_call_operand.vmem [shape: bf16[40,32], index: 4, kind: input, shape index: {}]
  %s5 = inlined_call_operand.vmem [shape: f32[40,1], index: 5, kind: input, shape index: {}]
  %s6 = inlined_call_operand.hbm [shape: f32[2,32,256], index: 6, kind: output, shape index: {}]
  %s7 = sld [smem:[#allocation0]]
  $region65: #{tpu_custom_call.1} parent=0
    _
  %s9 = ssub.s32 1, %s7
  %s10 = scalar_select 0, %s9, %s7
  $region1: #{tpu_custom_call.1} parent=0
    #allocation4 [shape = 'u8[65536]{0}', space=vmem, size = 0x10000, scoped, tag = 'input window, operand 1']
    #allocation5 [shape = 's32[2]{0}', space=sflag, size = 0x8, scoped, tag = 'scoped memory for tpu_custom_call.1']
    #allocation6 [shape = 's32[2]{0}', space=sflag, size = 0x8, scoped, tag = 'scoped memory for tpu_custom_call.1']
    #allocation7 [shape = 'u8[65536]{0}', space=vmem, size = 0x10000, scoped, tag = 'output window, operand 0']
    %11 = vsyncpa [#allocation5], 0
    %s12 = scalar_lea.sflag [#allocation5], 1
    %13 = vsyncpa %s12, 0
    %14 = vsyncpa [#allocation6], 0
    %s15 = scalar_lea.sflag [#allocation6], 1
    %16 = vsyncpa %s15, 0
    loop: start=0, step=1, limit=4
    $region2: #{tpu_custom_call.1} parent=1 // loop_pre_header
      _
    $region3: #{tpu_custom_call.1} parent=1 // loop_header
      %s18 = sphi 0, %s22
      %p19 = scmp.ge.s32.totalorder %s18, 4
      %s25 = sphi 0, %s37
      %s26 = sphi 0, %s33
      %s27 = sphi 0, %s25
      %s28 = sphi 0, %s26
      %s29 = sphi 0, %s27
      %s30 = sphi 0, %s28
      %s40 = sphi 0, %s42
      %s43 = sphi 0, %s40
      %s44 = sphi 0, %s43
      %s60 = sphi 0, %s44
      %s68 = sphi 0, %s70
      %s71 = sphi 0, %s68
      %s72 = sphi 0, %s71
      %s88 = sphi 0, %s72
      %s92 = sphi 0, %s92
      %s94 = sphi 0, %s92
      %s95 = sphi 0, %s94
      %s109 = sphi 0, %s95
      %s113 = sphi 0, %s113
      %s115 = sphi 0, %s113
      %s116 = sphi 0, %s115
      %s130 = sphi 0, %s116
      %s134 = sphi 0, %s134
      %s136 = sphi 0, %s134
      %s137 = sphi 0, %s136
      %s151 = sphi 0, %s137
      %s155 = sphi 0, %s155
      %s157 = sphi 0, %s155
      %s158 = sphi 0, %s157
      %s172 = sphi 0, %s158
      %s180 = sphi 0, %s182
      %s183 = sphi 0, %s180
      %s184 = sphi 0, %s183
      %s200 = sphi 0, %s184
    $region4: #{tpu_custom_call.1} parent=1 // loop_header_branch
      %21 = sbr.rel (%p19) target = $region8
    $region5: #{tpu_custom_call.1} parent=1 // loop_body
      %s23 = ssub.s32 %s18, 1
      %s24 = ssub.s32 %s18, 2
      %s31 = sadd.s32 1, %s26
      %p32 = scmp.ge.s32.totalorder %s31, 1
      %s33 = scalar_select %p32, 0, %s31
      %s34 = sadd.s32 1, %s25
      %s35 = scalar_select %p32, %s34, %s25
      %p36 = scmp.ge.s32.totalorder %s35, 2
      %s37 = scalar_select %p36, 0, %s35
      %s38 = ssub.s32 %s25, %s37
      %p39 = scmp.eq.s32.totalorder %s38, 0
      %s41 = sadd.s32 %s40, 1
      %s42 = scalar_select %p39, %s40, %s41
      %p45 = pneg %p39
      %p46 = scmp.eq.s32.totalorder %s18, 1
      %p47 = por %p45, %p46
      %p48 = scmp.ne.s32.totalorder %s40, %s43
      %p49 = scmp.eq.s32.totalorder %s18, 0
      %p50 = por %p48, %p49
      %p51 = scmp.ne.s32.totalorder %s40, %s43
      %p52 = scmp.eq.s32.totalorder %s23, 1
      %p53 = por %p51, %p52
      %p54 = scmp.ne.s32.totalorder %s43, %s44
      %p55 = scmp.eq.s32.totalorder %s23, 0
      %p56 = por %p54, %p55
      %p57 = scmp.ne.s32.totalorder %s43, %s44
      %p58 = scmp.eq.s32.totalorder %s24, 1
      %p59 = por %p57, %p58
      %p61 = scmp.ne.s32.totalorder %s44, %s60
      %p62 = scmp.eq.s32.totalorder %s24, 0
      %p63 = por %p61, %p62
      %s64 = ssub.s32 %s25, %s37
      %s65 = ssub.s32 %s26, %s33
      %s66 = sor.u32 %s64, %s65
      %p67 = scmp.eq.s32.totalorder %s66, 0
      %s69 = sadd.s32 %s68, 1
      %s70 = scalar_select %p67, %s68, %s69
      %p73 = pneg %p67
      %p74 = scmp.eq.s32.totalorder %s18, 1
      %p75 = por %p73, %p74
      %p76 = scmp.ne.s32.totalorder %s68, %s71
      %p77 = scmp.eq.s32.totalorder %s18, 0
      %p78 = por %p76, %p77
      %p79 = scmp.ne.s32.totalorder %s68, %s71
      %p80 = scmp.eq.s32.totalorder %s23, 1
      %p81 = por %p79, %p80
      %p82 = scmp.ne.s32.totalorder %s71, %s72
      %p83 = scmp.eq.s32.totalorder %s23, 0
      %p84 = por %p82, %p83
      %p85 = scmp.ne.s32.totalorder %s71, %s72
      %p86 = scmp.eq.s32.totalorder %s24, 1
      %p87 = por %p85, %p86
      %p89 = scmp.ne.s32.totalorder %s72, %s88
      %p90 = scmp.eq.s32.totalorder %s24, 0
      %p91 = por %p89, %p90
      %s93 = sadd.s32 %s92, 1
      %p96 = scmp.eq.s32.totalorder %s18, 1
      %p97 = scmp.ne.s32.totalorder %s92, %s94
      %p98 = scmp.eq.s32.totalorder %s18, 0
      %p99 = por %p97, %p98
      %p100 = scmp.ne.s32.totalorder %s92, %s94
      %p101 = scmp.eq.s32.totalorder %s23, 1
      %p102 = por %p100, %p101
      %p103 = scmp.ne.s32.totalorder %s94, %s95
      %p104 = scmp.eq.s32.totalorder %s23, 0
      %p105 = por %p103, %p104
      %p106 = scmp.ne.s32.totalorder %s94, %s95
      %p107 = scmp.eq.s32.totalorder %s24, 1
      %p108 = por %p106, %p107
      %p110 = scmp.ne.s32.totalorder %s95, %s109
      %p111 = scmp.eq.s32.totalorder %s24, 0
      %p112 = por %p110, %p111
      %s114 = sadd.s32 %s113, 1
      %p117 = scmp.eq.s32.totalorder %s18, 1
      %p118 = scmp.ne.s32.totalorder %s113, %s115
      %p119 = scmp.eq.s32.totalorder %s18, 0
      %p120 = por %p118, %p119
      %p121 = scmp.ne.s32.totalorder %s113, %s115
      %p122 = scmp.eq.s32.totalorder %s23, 1
      %p123 = por %p121, %p122
      %p124 = scmp.ne.s32.totalorder %s115, %s116
      %p125 = scmp.eq.s32.totalorder %s23, 0
      %p126 = por %p124, %p125
      %p127 = scmp.ne.s32.totalorder %s115, %s116
      %p128 = scmp.eq.s32.totalorder %s24, 1
      %p129 = por %p127, %p128
      %p131 = scmp.ne.s32.totalorder %s116, %s130
      %p132 = scmp.eq.s32.totalorder %s24, 0
      %p133 = por %p131, %p132
      %s135 = sadd.s32 %s134, 1
      %p138 = scmp.eq.s32.totalorder %s18, 1
      %p139 = scmp.ne.s32.totalorder %s134, %s136
      %p140 = scmp.eq.s32.totalorder %s18, 0
      %p141 = por %p139, %p140
      %p142 = scmp.ne.s32.totalorder %s134, %s136
      %p143 = scmp.eq.s32.totalorder %s23, 1
      %p144 = por %p142, %p143
      %p145 = scmp.ne.s32.totalorder %s136, %s137
      %p146 = scmp.eq.s32.totalorder %s23, 0
      %p147 = por %p145, %p146
      %p148 = scmp.ne.s32.totalorder %s136, %s137
      %p149 = scmp.eq.s32.totalorder %s24, 1
      %p150 = por %p148, %p149
      %p152 = scmp.ne.s32.totalorder %s137, %s151
      %p153 = scmp.eq.s32.totalorder %s24, 0
      %p154 = por %p152, %p153
      %s156 = sadd.s32 %s155, 1
      %p159 = scmp.eq.s32.totalorder %s18, 1
      %p160 = scmp.ne.s32.totalorder %s155, %s157
      %p161 = scmp.eq.s32.totalorder %s18, 0
      %p162 = por %p160, %p161
      %p163 = scmp.ne.s32.totalorder %s155, %s157
      %p164 = scmp.eq.s32.totalorder %s23, 1
      %p165 = por %p163, %p164
      %p166 = scmp.ne.s32.totalorder %s157, %s158
      %p167 = scmp.eq.s32.totalorder %s23, 0
      %p168 = por %p166, %p167
      %p169 = scmp.ne.s32.totalorder %s157, %s158
      %p170 = scmp.eq.s32.totalorder %s24, 1
      %p171 = por %p169, %p170
      %p173 = scmp.ne.s32.totalorder %s158, %s172
      %p174 = scmp.eq.s32.totalorder %s24, 0
      %p175 = por %p173, %p174
      %s176 = ssub.s32 %s25, %s37
      %s177 = ssub.s32 %s26, %s33
      %s178 = sor.u32 %s176, %s177
      %p179 = scmp.eq.s32.totalorder %s178, 0
      %s181 = sadd.s32 %s180, 1
      %s182 = scalar_select %p179, %s180, %s181
      %p185 = pneg %p179
      %p186 = scmp.eq.s32.totalorder %s18, 1
      %p187 = por %p185, %p186
      %p188 = scmp.ne.s32.totalorder %s180, %s183
      %p189 = scmp.eq.s32.totalorder %s18, 0
      %p190 = por %p188, %p189
      %p191 = scmp.ne.s32.totalorder %s180, %s183
      %p192 = scmp.eq.s32.totalorder %s23, 1
      %p193 = por %p191, %p192
      %p194 = scmp.ne.s32.totalorder %s183, %s184
      %p195 = scmp.eq.s32.totalorder %s23, 0
      %p196 = por %p194, %p195
      %p197 = scmp.ne.s32.totalorder %s183, %s184
      %p198 = scmp.eq.s32.totalorder %s24, 1
      %p199 = por %p197, %p198
      %p201 = scmp.ne.s32.totalorder %s184, %s200
      %p202 = scmp.eq.s32.totalorder %s24, 0
      %p203 = por %p201, %p202
      %p204 = scmp.le.s32.totalorder 1, %s18
      %p205 = scmp.lt.s32.totalorder %s18, 3
      %p206 = pnand %p204, %p205
      %p207 = pneg %p206
      // Predicated region
      $region9: #{tpu_custom_call.1} parent=5 // pred_check
        _
      $region10: #{tpu_custom_call.1} parent=5 // pred_check_branch
        %209 = sbr.rel (%p206) target = $region12
      $region11: #{tpu_custom_call.1} parent=5 // pred_region
        %s210 = ssub.s32 %s18, 1
        // Predicated region
        $region13: #{tpu_custom_call.1} parent=11 // pred_check
          %p211 = pneg %p105
        $region14: #{tpu_custom_call.1} parent=11 // pred_check_branch
          %213 = sbr.rel (%p211) target = $region16
        $region15: #{tpu_custom_call.1} parent=11 // pred_region
          _
        $region16: #{tpu_custom_call.1} parent=11 // pred_fallthru
          _
        // Predicated region
        $region17: #{tpu_custom_call.1} parent=11 // pred_check
          %p214 = pneg %p126
        $region18: #{tpu_custom_call.1} parent=11 // pred_check_branch
          %216 = sbr.rel (%p214) target = $region20
        $region19: #{tpu_custom_call.1} parent=11 // pred_region
          _
        $region20: #{tpu_custom_call.1} parent=11 // pred_fallthru
          _
        // Predicated region
        $region21: #{tpu_custom_call.1} parent=11 // pred_check
          %p217 = pneg %p147
        $region22: #{tpu_custom_call.1} parent=11 // pred_check_branch
          %219 = sbr.rel (%p217) target = $region24
        $region23: #{tpu_custom_call.1} parent=11 // pred_region
          _
        $region24: #{tpu_custom_call.1} parent=11 // pred_fallthru
          _
        // Predicated region
        $region25: #{tpu_custom_call.1} parent=11 // pred_check
          %p220 = pneg %p168
        $region26: #{tpu_custom_call.1} parent=11 // pred_check_branch
          %222 = sbr.rel (%p220) target = $region28
        $region27: #{tpu_custom_call.1} parent=11 // pred_region
          _
        $region28: #{tpu_custom_call.1} parent=11 // pred_fallthru
          _
      $region12: #{tpu_custom_call.1} parent=5 // pred_fallthru
        _
      %p223 = scmp.lt.s32.totalorder %s18, 2
      // Predicated region
      $region29: #{tpu_custom_call.1} parent=5 // pred_check
        %p224 = pneg %p223
      $region30: #{tpu_custom_call.1} parent=5 // pred_check_branch
        %226 = sbr.rel (%p224) target = $region32
      $region31: #{tpu_custom_call.1} parent=5 // pred_region
        // Predicated region
        $region33: #{tpu_custom_call.1} parent=31 // pred_check
          %p227 = pneg %p50
        $region34: #{tpu_custom_call.1} parent=31 // pred_check_branch
          %229 = sbr.rel (%p227) target = $region36
        $region35: #{tpu_custom_call.1} parent=31 // pred_region
          %p230 = scmp.lt.s32.totalorder %s25, 1
          %s231 = scalar_select %p230, %s25, 1
          %s232 = smul.addr %s231, 8
          %s233 = smul.addr %s232, 4
          %s234 = scalar_lea.vmem %s0, %s233
        $region36: #{tpu_custom_call.1} parent=31 // pred_fallthru
          _
        // Predicated region
        $region37: #{tpu_custom_call.1} parent=31 // pred_check
          %p235 = pneg %p78
        $region38: #{tpu_custom_call.1} parent=31 // pred_check_branch
          %237 = sbr.rel (%p235) target = $region40
        $region39: #{tpu_custom_call.1} parent=31 // pred_region
          %s238 = sand.u32 %s68, 1
          %s239 = scalar_lea.sflag [#allocation5], %s238
          %s240 = sand.u32 %s68, 1
          %s241 = smul.addr %s240, 64
          %s242 = scalar_lea.vmem [#allocation4], %s241
          %s243 = smul.u32 2, %s26
          %s245 = ssub.s32 1024, 1024
          %246 = vsyncadd %s239, %s245
          %s247 = smul.addr %s25, 8
          %s248 = sadd.s32 %s243, %s247
          %s249 = smul.addr %s248, 128
          %s250 = scalar_lea.hbm %s1, %s249
          %s251 = sshll.u32 %s242, 4
          %s252 = int_to_ptr.vmem [resolvable:$true] %s251
          %257 = dma.hbm_to_vmem [thread:$0]  %s250, 1024, %s252, %s239, 256, 256, 16
        $region40: #{tpu_custom_call.1} parent=31 // pred_fallthru
          _
      $region32: #{tpu_custom_call.1} parent=5 // pred_fallthru
        _
      %p258 = scmp.le.s32.totalorder 1, %s18
      %p259 = scmp.lt.s32.totalorder %s18, 3
      %p260 = pnand %p258, %p259
      %p261 = pneg %p260
      // Predicated region
      $region41: #{tpu_custom_call.1} parent=5 // pred_check
        _
      $region42: #{tpu_custom_call.1} parent=5 // pred_check_branch
        %263 = sbr.rel (%p260) target = $region44
      $region43: #{tpu_custom_call.1} parent=5 // pred_region
        %s264 = ssub.s32 %s18, 1
        %s265 = sand.u32 %s71, 1
        %s266 = scalar_lea.sflag [#allocation5], %s265
        %s267 = sand.u32 %s71, 1
        %s268 = smul.addr %s267, 64
        %s269 = scalar_lea.vmem [#allocation4], %s268
        // Predicated region
        $region45: #{tpu_custom_call.1} parent=43 // pred_check
          %p270 = pneg %p84
        $region46: #{tpu_custom_call.1} parent=43 // pred_check_branch
          %272 = sbr.rel (%p270) target = $region48
        $region47: #{tpu_custom_call.1} parent=43 // pred_region
          %273 = dma.done %s266, 1024
        $region48: #{tpu_custom_call.1} parent=43 // pred_fallthru
          _
        %p274 = scmp.lt.s32.totalorder %s27, 1
        %s275 = scalar_select %p274, %s27, 1
        %s276 = smul.addr %s275, 8
        %s277 = smul.addr %s276, 4
        %s278 = scalar_lea.vmem %s0, %s277
        %p279 = pneg %p56
        %p280 = pneg %p53
        %s281 = sand.u32 %s71, 1
        %s282 = scalar_lea.sflag [#allocation5], %s281
        %s283 = sand.u32 %s71, 1
        %s284 = smul.addr %s283, 64
        %s285 = scalar_lea.vmem [#allocation4], %s284
        %p286 = pneg %p84
        %p287 = pneg %p81
        %p288 = pneg %p105
        %p289 = pneg %p102
        %p290 = pneg %p126
        %p291 = pneg %p123
        %p292 = pneg %p147
        %p293 = pneg %p144
        %p294 = pneg %p168
        %p295 = pneg %p165
        %p296 = pneg %p196
        %p297 = pneg %p193
        %s298 = sand.u32 %s183, 1
        %s299 = scalar_lea.sflag [#allocation6], %s298
        %s300 = sand.u32 %s183, 1
        %s301 = smul.addr %s300, 64
        %s302 = scalar_lea.vmem [#allocation7], %s301
        %p303 = scmp.lt.s32.totalorder %s27, 1
        %s304 = scalar_select %p303, %s27, 1
        %s305 = smul.addr %s304, 8
        %s306 = smul.addr %s305, 4
        %s307 = scalar_lea.vmem %s0, %s306
        %s308 = smul.u32 2, %s28
        %s309 = smul.u32 2, %s28
        %p311 = scmp.eq.s32.totalorder %s28, 0
        // Predicated region
        $region49: #{tpu_custom_call.1} parent=43 // pred_check
          %p312 = pneg %p311
        $region50: #{tpu_custom_call.1} parent=43 // pred_check_branch
          %314 = sbr.rel (%p312) target = $region52
        $region51: #{tpu_custom_call.1} parent=43 // pred_region
          %v315 = vld [vmem:[%s4] sm:$0xf]
          %v316 = vld [vmem:[%s4 + $0x4] sm:$0xf]
          %v317 = vld [vmem:[%s4 + $0x8] sm:$0xf]
          %v318 = vld [vmem:[%s4 + $0xc] sm:$0xf]
          %v319 = vld [vmem:[%s4 + $0x10] sm:$0xf]
          %v320 = vld [vmem:[%s5] sm:$0xff]
          %v321 = vld [vmem:[%s5 + $0x8] sm:$0xff]
          %v322 = vld [vmem:[%s5 + $0x10] sm:$0xff]
          %v323 = vld [vmem:[%s5 + $0x18] sm:$0xff]
          %v324 = vld [vmem:[%s5 + $0x20] sm:$0xff]
          %v325 = vld [vmem:[%s307] sm:$0xff]
          %v326 = vld [vmem:[%s307 + $0x8] sm:$0xff]
          %v327 = vld [vmem:[%s307 + $0x10] sm:$0xff]
          %v328 = vld [vmem:[%s307 + $0x18] sm:$0xff]
          %330 = vset.pattern.permute.xlu0 0
          %331 = vperm.xlu0 %330, %v320
          %v332 = vpop.permute.xlu0 %331
          %335 = vset.pattern.permute.xlu0 0
          %336 = vperm.xlu0 %335, %v321
          %v337 = vpop.permute.xlu0 %336
          %340 = vset.pattern.permute.xlu0 0
          %341 = vperm.xlu0 %340, %v322
          %v342 = vpop.permute.xlu0 %341
          %345 = vset.pattern.permute.xlu0 0
          %346 = vperm.xlu0 %345, %v323
          %v347 = vpop.permute.xlu0 %346
          %350 = vset.pattern.permute.xlu0 0
          %351 = vperm.xlu0 %350, %v324
          %v352 = vpop.permute.xlu0 %351
          %v359 = vunpack.c.l.b16 %v315
          %v360 = vunpack.c.l.b16 %v316
          %v361 = vunpack.c.l.b16 %v317
          %v362 = vunpack.c.l.b16 %v318
          %v363 = vunpack.c.l.b16 %v319
          %v364 = vpack.c.b16 %v360, %v359
          %v365 = vpack.c.b16 %v362, %v361
          %v366 = vpack.c.b16 %v363, %v363
          %v371 = vunpack.c.l.b16 %v325
          %v372 = vunpack.c.h.b16 %v325
          %v373 = vunpack.c.l.b16 %v326
          %v374 = vunpack.c.h.b16 %v326
          %v375 = vunpack.c.l.b16 %v327
          %v376 = vunpack.c.h.b16 %v327
          %v377 = vunpack.c.l.b16 %v328
          %v378 = vunpack.c.h.b16 %v328
          %v379 = vpack.c.b16 %v373, %v371
          %v380 = vpack.c.b16 %v374, %v372
          %v381 = vpack.c.b16 %v377, %v375
          %v382 = vpack.c.b16 %v378, %v376
          %vm387 = vcmask 261120
          %v389 = vsel %vm387, %v364, 0
          %v392 = vsel %vm387, %v365, 0
          %v395 = vsel %vm387, %v366, 0
          %397 = vmatprep.subr.bf16.mxu0 %v380
          %398 = vmatpush1.bf16.msra.mxu0 %v379
          %399 = vmatprep.subr.bf16.mxu0 %v382
          %400 = vmatpush1.bf16.msra.mxu0 %v381
          %401 = vmatprep.subr.bf16.mxu0 0
          %402 = vmatpush1.bf16.msra.mxu0 0
          %403 = vmatprep.subr.bf16.mxu0 0
          %404 = vmatpush1.bf16.msra.mxu0 0
          %405 = vmatprep.subr.bf16.mxu0 0
          %406 = vmatpush1.bf16.msra.mxu0 0
          %407 = vmatprep.subr.bf16.mxu0 0
          %408 = vmatpush1.bf16.msra.mxu0 0
          %409 = vmatprep.subr.bf16.mxu0 0
          %410 = vmatpush1.bf16.msra.mxu0 0
          %411 = vmatprep.subr.bf16.mxu0 0
          %412 = vmatpush1.bf16.msra.mxu0 0
          %413 = vmatprep.subr.bf16.mxu0 0
          %414 = vmatpush1.bf16.msra.mxu0 0
          %415 = vmatprep.subr.bf16.mxu0 0
          %416 = vmatpush1.bf16.msra.mxu0 0
          %417 = vmatprep.subr.bf16.mxu0 0
          %418 = vmatpush1.bf16.msra.mxu0 0
          %419 = vmatprep.subr.bf16.mxu0 0
          %420 = vmatpush1.bf16.msra.mxu0 0
          %421 = vmatprep.subr.bf16.mxu0 0
          %422 = vmatpush1.bf16.msra.mxu0 0
          %423 = vmatprep.subr.bf16.mxu0 0
          %424 = vmatpush1.bf16.msra.mxu0 0
          %425 = vmatprep.subr.bf16.mxu0 0
          %426 = vmatpush1.bf16.msra.mxu0 0
          %427 = vmatprep.subr.bf16.mxu0 0
          %428 = vmatpush1.bf16.msra.mxu0 0
          %429 = vmatprep.mubr.bf16.mxu0 0
          %430 = vmatmul.mubr.bf16.gmra.mrb[0].mxu0 %v389
          %v431 = vpop.f32.mrb[0].mxu0
          %v432 = vadd.f32 %v332, %v431
          %v433 = vpop.f32.mrb[0].mxu0
          %v434 = vadd.f32 %v332, %v433
          %v435 = vpop.f32.mrb[0].mxu0
          %v436 = vadd.f32 %v337, %v435
          %v437 = vpop.f32.mrb[0].mxu0
          %v438 = vadd.f32 %v337, %v437
          %439 = vmatprep.mubr.bf16.mxu0 0
          %440 = vmatmul.mubr.bf16.gmra.mrb[0].mxu0 %v392
          %v441 = vpop.f32.mrb[0].mxu0
          %v442 = vadd.f32 %v342, %v441
          %v443 = vpop.f32.mrb[0].mxu0
          %v444 = vadd.f32 %v342, %v443
          %v445 = vpop.f32.mrb[0].mxu0
          %v446 = vadd.f32 %v347, %v445
          %v447 = vpop.f32.mrb[0].mxu0
          %v448 = vadd.f32 %v347, %v447
          %449 = vmatprep.mubr.bf16.mxu0 0
          %450 = vmatmul.mubr.bf16.gmra.mrb[0].mxu0 %v395
          %v451 = vpop.f32.mrb[0].mxu0
          %v452 = vadd.f32 %v352, %v451
          %v453 = vpop.f32.mrb[0].mxu0
          %v454 = vadd.f32 %v352, %v453
          %v455 = vpop.f32.mrb[0].mxu0
          %v456 = vpop.f32.mrb[0].mxu0
          %457 = vdwg.mxu0
          %v458 = vpack.c.bf16 %v432, %v432
          %v459 = vpack.c.bf16 %v434, %v434
          %v462 = vunpack.c.l.b16 %v458
          %v463 = vunpack.c.l.b16 %v459
          %v464 = vpack.c.b16 %v463, %v462
          %466 = vst [vmem:[#allocation2] sm:$0xff] %v464
          %v467 = vpack.c.bf16 %v442, %v436
          %v468 = vpack.c.bf16 %v444, %v438
          %v469 = vpack.c.bf16 %v452, %v446
          %v470 = vpack.c.bf16 %v454, %v448
          %471 = vst [vmem:[#allocation3] sm:$0xff] %v467
          %472 = vst [vmem:[#allocation3 + $0x8] sm:$0xff] %v468
          %473 = vst [vmem:[#allocation3 + $0x10] sm:$0xff] %v469
          %474 = vst [vmem:[#allocation3 + $0x18] sm:$0xff] %v470
        $region52: #{tpu_custom_call.1} parent=43 // pred_fallthru
          _
        %s475 = smul.u32 %s28, 256
        %v476 = vld [vmem:[%s2] sm:$0xf]
        %v477 = vld [vmem:[%s3] sm:$0xff]
        %v478 = vld [vmem:[#allocation2] sm:$0xff]
        %v479 = vld [vmem:[#allocation3] sm:$0xff]
        %v480 = vld [vmem:[#allocation3 + $0x8] sm:$0xff]
        %v481 = vld [vmem:[#allocation3 + $0x10] sm:$0xff]
        %v482 = vld [vmem:[#allocation3 + $0x18] sm:$0xff]
        %s483 = sshra.s32 %s475, 7
        %s484 = sand.u32 %s475, 127
        %s485 = smul.addr %s483, 4
        %s486 = scalar_lea.vmem %s307, %s485
        %v487 = vld [vmem:[%s486] sm:$0xff]
        %v488 = vld [vmem:[%s486 + $0x8] sm:$0xff]
        %v489 = vld [vmem:[%s486 + $0x10] sm:$0xff]
        %v490 = vld [vmem:[%s486 + $0x18] sm:$0xff]
        %492 = vset.pattern.permute.xlu0 0
        %493 = vperm.xlu0 %492, %v477
        %v494 = vpop.permute.xlu0 %493
        %v500 = vunpack.c.l.b16 %v487
        %v501 = vunpack.c.h.b16 %v487
        %v502 = vunpack.c.l.b16 %v488
        %v503 = vunpack.c.h.b16 %v488
        %v504 = vunpack.c.l.b16 %v489
        %v505 = vunpack.c.h.b16 %v489
        %v506 = vunpack.c.l.b16 %v490
        %v507 = vunpack.c.h.b16 %v490
        %v508 = vpack.c.b16 %v502, %v500
        %v509 = vpack.c.b16 %v503, %v501
        %v510 = vpack.c.b16 %v506, %v504
        %v511 = vpack.c.b16 %v507, %v505
        %vm516 = vcmask 261120
        %v518 = vsel %vm516, %v476, 0
        %520 = vmatprep.subr.bf16.mxu0 %v509
        %521 = vmatpush1.bf16.msra.mxu0 %v508
        %522 = vmatprep.subr.bf16.mxu0 %v511
        %523 = vmatpush1.bf16.msra.mxu0 %v510
        %524 = vmatprep.subr.bf16.mxu0 0
        %525 = vmatpush1.bf16.msra.mxu0 0
        %526 = vmatprep.subr.bf16.mxu0 0
        %527 = vmatpush1.bf16.msra.mxu0 0
        %528 = vmatprep.subr.bf16.mxu0 0
        %529 = vmatpush1.bf16.msra.mxu0 0
        %530 = vmatprep.subr.bf16.mxu0 0
        %531 = vmatpush1.bf16.msra.mxu0 0
        %532 = vmatprep.subr.bf16.mxu0 0
        %533 = vmatpush1.bf16.msra.mxu0 0
        %534 = vmatprep.subr.bf16.mxu0 0
        %535 = vmatpush1.bf16.msra.mxu0 0
        %536 = vmatprep.subr.bf16.mxu0 0
        %537 = vmatpush1.bf16.msra.mxu0 0
        %538 = vmatprep.subr.bf16.mxu0 0
        %539 = vmatpush1.bf16.msra.mxu0 0
        %540 = vmatprep.subr.bf16.mxu0 0
        %541 = vmatpush1.bf16.msra.mxu0 0
        %542 = vmatprep.subr.bf16.mxu0 0
        %543 = vmatpush1.bf16.msra.mxu0 0
        %544 = vmatprep.subr.bf16.mxu0 0
        %545 = vmatpush1.bf16.msra.mxu0 0
        %546 = vmatprep.subr.bf16.mxu0 0
        %547 = vmatpush1.bf16.msra.mxu0 0
        %548 = vmatprep.subr.bf16.mxu0 0
        %549 = vmatpush1.bf16.msra.mxu0 0
        %550 = vmatprep.subr.bf16.mxu0 0
        %551 = vmatpush1.bf16.msra.mxu0 0
        %552 = vmatprep.mubr.bf16.mxu0 0
        %553 = vmatmul.mubr.bf16.gmra.mrb[0].mxu0 %v518
        %v554 = vpop.f32.mrb[0].mxu0
        %v555 = vadd.f32 %v494, %v554
        %v556 = vpop.f32.mrb[0].mxu0
        %v557 = vadd.f32 %v494, %v556
        %v558 = vpop.f32.mrb[0].mxu0
        %v559 = vpop.f32.mrb[0].mxu0
        %560 = vdwg.mxu0
        %561 = vxpose.xlu0.b32.start [1/16] %v555, 128
        %562 = vxpose.xlu0.b32.cont [2/16] 0.0, 128
        %563 = vxpose.xlu0.b32.cont [3/16] 0.0, 128
        %564 = vxpose.xlu0.b32.cont [4/16] 0.0, 128
        %565 = vxpose.xlu0.b32.cont [5/16] 0.0, 128
        %566 = vxpose.xlu0.b32.cont [6/16] 0.0, 128
        %567 = vxpose.xlu0.b32.cont [7/16] 0.0, 128
        %568 = vxpose.xlu0.b32.cont [8/16] 0.0, 128
        %569 = vxpose.xlu0.b32.cont [9/16] 0.0, 128
        %570 = vxpose.xlu0.b32.cont [10/16] 0.0, 128
        %571 = vxpose.xlu0.b32.cont [11/16] 0.0, 128
        %572 = vxpose.xlu0.b32.cont [12/16] 0.0, 128
        %573 = vxpose.xlu0.b32.cont [13/16] 0.0, 128
        %574 = vxpose.xlu0.b32.cont [14/16] 0.0, 128
        %575 = vxpose.xlu0.b32.cont [15/16] 0.0, 128
        %576 = vxpose.xlu0.b32.end [16/16] 0.0, 128
        %v577 = vpop.trf.xlu0
        %v578 = vpop.trf.xlu0
        %v579 = vpop.trf.xlu0
        %v580 = vpop.trf.xlu0
        %v581 = vpop.trf.xlu0
        %v582 = vpop.trf.xlu0
        %v583 = vpop.trf.xlu0
        %v584 = vpop.trf.xlu0
        %v585 = vpop.trf.xlu0
        %v586 = vpop.trf.xlu0
        %v587 = vpop.trf.xlu0
        %v588 = vpop.trf.xlu0
        %v589 = vpop.trf.xlu0
        %v590 = vpop.trf.xlu0
        %v591 = vpop.trf.xlu0
        %v592 = vpop.trf.xlu0
        %593 = vxpose.xlu0.b32.start [1/16] %v557, 128
        %594 = vxpose.xlu0.b32.cont [2/16] 0.0, 128
        %595 = vxpose.xlu0.b32.cont [3/16] 0.0, 128
        %596 = vxpose.xlu0.b32.cont [4/16] 0.0, 128
        %597 = vxpose.xlu0.b32.cont [5/16] 0.0, 128
        %598 = vxpose.xlu0.b32.cont [6/16] 0.0, 128
        %599 = vxpose.xlu0.b32.cont [7/16] 0.0, 128
        %600 = vxpose.xlu0.b32.cont [8/16] 0.0, 128
        %601 = vxpose.xlu0.b32.cont [9/16] 0.0, 128
        %602 = vxpose.xlu0.b32.cont [10/16] 0.0, 128
        %603 = vxpose.xlu0.b32.cont [11/16] 0.0, 128
        %604 = vxpose.xlu0.b32.cont [12/16] 0.0, 128
        %605 = vxpose.xlu0.b32.cont [13/16] 0.0, 128
        %606 = vxpose.xlu0.b32.cont [14/16] 0.0, 128
        %607 = vxpose.xlu0.b32.cont [15/16] 0.0, 128
        %608 = vxpose.xlu0.b32.end [16/16] 0.0, 128
        %v609 = vpop.trf.xlu0
        %v610 = vpop.trf.xlu0
        %v611 = vpop.trf.xlu0
        %v612 = vpop.trf.xlu0
        %v613 = vpop.trf.xlu0
        %v614 = vpop.trf.xlu0
        %v615 = vpop.trf.xlu0
        %v616 = vpop.trf.xlu0
        %v617 = vpop.trf.xlu0
        %v618 = vpop.trf.xlu0
        %v619 = vpop.trf.xlu0
        %v620 = vpop.trf.xlu0
        %v621 = vpop.trf.xlu0
        %v622 = vpop.trf.xlu0
        %v623 = vpop.trf.xlu0
        %v624 = vpop.trf.xlu0
        %v625 = vpack.c.bf16 %v578, %v577
        %v626 = vpack.c.bf16 %v580, %v579
        %v627 = vpack.c.bf16 %v582, %v581
        %v628 = vpack.c.bf16 %v584, %v583
        %v629 = vpack.c.bf16 %v586, %v585
        %v630 = vpack.c.bf16 %v588, %v587
        %v631 = vpack.c.bf16 %v590, %v589
        %v632 = vpack.c.bf16 %v592, %v591
        %v633 = vpack.c.bf16 %v610, %v609
        %v634 = vpack.c.bf16 %v612, %v611
        %v635 = vpack.c.bf16 %v614, %v613
        %v636 = vpack.c.bf16 %v616, %v615
        %v637 = vpack.c.bf16 %v618, %v617
        %v638 = vpack.c.bf16 %v620, %v619
        %v639 = vpack.c.bf16 %v622, %v621
        %v640 = vpack.c.bf16 %v624, %v623
        %v642 = vunpack.c.l.b16 %v478
        %v643 = vunpack.c.h.b16 %v478
        %v644 = vpack.c.b16 %v642, %v642
        %v645 = vpack.c.b16 %v643, %v643
        %vm646 = vcmask 64512
        %v648 = vsel %vm646, %v625, 0
        %v651 = vsel %vm646, %v626, 0
        %v654 = vsel %vm646, %v627, 0
        %v657 = vsel %vm646, %v628, 0
        %v660 = vsel %vm646, %v629, 0
        %v663 = vsel %vm646, %v630, 0
        %v666 = vsel %vm646, %v631, 0
        %v669 = vsel %vm646, %v632, 0
        %v672 = vsel %vm646, %v633, 0
        %v675 = vsel %vm646, %v634, 0
        %v678 = vsel %vm646, %v635, 0
        %v681 = vsel %vm646, %v636, 0
        %v684 = vsel %vm646, %v637, 0
        %v687 = vsel %vm646, %v638, 0
        %v690 = vsel %vm646, %v639, 0
        %v693 = vsel %vm646, %v640, 0
        %vm695 = vcmask 1043456
        %v697 = vsel %vm695, %v644, 0
        %v700 = vsel %vm695, %v645, 0
        %702 = vmatprep.subr.bf16.mxu0 %v700
        %703 = vmatpush1.bf16.msra.mxu0 %v697
        %704 = vmatprep.subr.bf16.mxu0 0
        %705 = vmatpush1.bf16.msra.mxu0 0
        %706 = vmatprep.subr.bf16.mxu0 0
        %707 = vmatpush1.bf16.msra.mxu0 0
        %708 = vmatprep.subr.bf16.mxu0 0
        %709 = vmatpush1.bf16.msra.mxu0 0
        %710 = vmatprep.subr.bf16.mxu0 0
        %711 = vmatpush1.bf16.msra.mxu0 0
        %712 = vmatprep.subr.bf16.mxu0 0
        %713 = vmatpush1.bf16.msra.mxu0 0
        %714 = vmatprep.subr.bf16.mxu0 0
        %715 = vmatpush1.bf16.msra.mxu0 0
        %716 = vmatprep.subr.bf16.mxu0 0
        %717 = vmatpush1.bf16.msra.mxu0 0
        %718 = vmatprep.subr.bf16.mxu0 0
        %719 = vmatpush1.bf16.msra.mxu0 0
        %720 = vmatprep.subr.bf16.mxu0 0
        %721 = vmatpush1.bf16.msra.mxu0 0
        %722 = vmatprep.subr.bf16.mxu0 0
        %723 = vmatpush1.bf16.msra.mxu0 0
        %724 = vmatprep.subr.bf16.mxu0 0
        %725 = vmatpush1.bf16.msra.mxu0 0
        %726 = vmatprep.subr.bf16.mxu0 0
        %727 = vmatpush1.bf16.msra.mxu0 0
        %728 = vmatprep.subr.bf16.mxu0 0
        %729 = vmatpush1.bf16.msra.mxu0 0
        %730 = vmatprep.subr.bf16.mxu0 0
        %731 = vmatpush1.bf16.msra.mxu0 0
        %732 = vmatprep.subr.bf16.mxu0 0
        %733 = vmatpush1.bf16.msra.mxu0 0
        %734 = vmatprep.mubr.bf16.mxu0 0
        %735 = vmatmul.mubr.bf16.gmra.mrb[0].mxu0 %v648
        %v736 = vpop.f32.mrb[0].mxu0
        %v737 = vadd.f32 0.0, %v736
        %v738 = vpop.f32.mrb[0].mxu0
        %v739 = vadd.f32 0.0, %v738
        %v740 = vpop.f32.mrb[0].mxu0
        %v741 = vadd.f32 0.0, %v740
        %v742 = vpop.f32.mrb[0].mxu0
        %v743 = vadd.f32 0.0, %v742
        %744 = vmatprep.mubr.bf16.mxu0 0
        %745 = vmatmul.mubr.bf16.gmra.mrb[0].mxu0 %v651
        %v746 = vpop.f32.mrb[0].mxu0
        %v747 = vadd.f32 0.0, %v746
        %v748 = vpop.f32.mrb[0].mxu0
        %v749 = vadd.f32 0.0, %v748
        %v750 = vpop.f32.mrb[0].mxu0
        %v751 = vadd.f32 0.0, %v750
        %v752 = vpop.f32.mrb[0].mxu0
        %v753 = vadd.f32 0.0, %v752
        %754 = vmatprep.mubr.bf16.mxu0 0
        %755 = vmatmul.mubr.bf16.gmra.mrb[0].mxu0 %v654
        %v756 = vpop.f32.mrb[0].mxu0
        %v757 = vadd.f32 0.0, %v756
        %v758 = vpop.f32.mrb[0].mxu0
        %v759 = vadd.f32 0.0, %v758
        %v760 = vpop.f32.mrb[0].mxu0
        %v761 = vadd.f32 0.0, %v760
        %v762 = vpop.f32.mrb[0].mxu0
        %v763 = vadd.f32 0.0, %v762
        %764 = vmatprep.mubr.bf16.mxu0 0
        %765 = vmatmul.mubr.bf16.gmra.mrb[0].mxu0 %v657
        %v766 = vpop.f32.mrb[0].mxu0
        %v767 = vadd.f32 0.0, %v766
        %v768 = vpop.f32.mrb[0].mxu0
        %v769 = vadd.f32 0.0, %v768
        %v770 = vpop.f32.mrb[0].mxu0
        %v771 = vadd.f32 0.0, %v770
        %v772 = vpop.f32.mrb[0].mxu0
        %v773 = vadd.f32 0.0, %v772
        %774 = vmatprep.mubr.bf16.mxu0 0
        %775 = vmatmul.mubr.bf16.gmra.mrb[0].mxu0 %v660
        %v776 = vpop.f32.mrb[0].mxu0
        %v777 = vadd.f32 0.0, %v776
        %v778 = vpop.f32.mrb[0].mxu0
        %v779 = vadd.f32 0.0, %v778
        %v780 = vpop.f32.mrb[0].mxu0
        %v781 = vadd.f32 0.0, %v780
        %v782 = vpop.f32.mrb[0].mxu0
        %v783 = vadd.f32 0.0, %v782
        %784 = vmatprep.mubr.bf16.mxu0 0
        %785 = vmatmul.mubr.bf16.gmra.mrb[0].mxu0 %v663
        %v786 = vpop.f32.mrb[0].mxu0
        %v787 = vadd.f32 0.0, %v786
        %v788 = vpop.f32.mrb[0].mxu0
        %v789 = vadd.f32 0.0, %v788
        %v790 = vpop.f32.mrb[0].mxu0
        %v791 = vadd.f32 0.0, %v790
        %v792 = vpop.f32.mrb[0].mxu0
        %v793 = vadd.f32 0.0, %v792
        %794 = vmatprep.mubr.bf16.mxu0 0
        %795 = vmatmul.mubr.bf16.gmra.mrb[0].mxu0 %v666
        %v796 = vpop.f32.mrb[0].mxu0
        %v797 = vadd.f32 0.0, %v796
        %v798 = vpop.f32.mrb[0].mxu0
        %v799 = vadd.f32 0.0, %v798
        %v800 = vpop.f32.mrb[0].mxu0
        %v801 = vadd.f32 0.0, %v800
        %v802 = vpop.f32.mrb[0].mxu0
        %v803 = vadd.f32 0.0, %v802
        %804 = vmatprep.mubr.bf16.mxu0 0
        %805 = vmatmul.mubr.bf16.gmra.mrb[0].mxu0 %v669
        %v806 = vpop.f32.mrb[0].mxu0
        %v807 = vadd.f32 0.0, %v806
        %v808 = vpop.f32.mrb[0].mxu0
        %v809 = vadd.f32 0.0, %v808
        %v810 = vpop.f32.mrb[0].mxu0
        %v811 = vadd.f32 0.0, %v810
        %v812 = vpop.f32.mrb[0].mxu0
        %v813 = vadd.f32 0.0, %v812
        %814 = vmatprep.mubr.bf16.mxu0 0
        %815 = vmatmul.mubr.bf16.gmra.mrb[0].mxu0 %v672
        %v816 = vpop.f32.mrb[0].mxu0
        %v817 = vadd.f32 0.0, %v816
        %v818 = vpop.f32.mrb[0].mxu0
        %v819 = vadd.f32 0.0, %v818
        %v820 = vpop.f32.mrb[0].mxu0
        %v821 = vadd.f32 0.0, %v820
        %v822 = vpop.f32.mrb[0].mxu0
        %v823 = vadd.f32 0.0, %v822
        %824 = vmatprep.mubr.bf16.mxu0 0
        %825 = vmatmul.mubr.bf16.gmra.mrb[0].mxu0 %v675
        %v826 = vpop.f32.mrb[0].mxu0
        %v827 = vadd.f32 0.0, %v826
        %v828 = vpop.f32.mrb[0].mxu0
        %v829 = vadd.f32 0.0, %v828
        %v830 = vpop.f32.mrb[0].mxu0
        %v831 = vadd.f32 0.0, %v830
        %v832 = vpop.f32.mrb[0].mxu0
        %v833 = vadd.f32 0.0, %v832
        %834 = vmatprep.mubr.bf16.mxu0 0
        %835 = vmatmul.mubr.bf16.gmra.mrb[0].mxu0 %v678
        %v836 = vpop.f32.mrb[0].mxu0
        %v837 = vadd.f32 0.0, %v836
        %v838 = vpop.f32.mrb[0].mxu0
        %v839 = vadd.f32 0.0, %v838
        %v840 = vpop.f32.mrb[0].mxu0
        %v841 = vadd.f32 0.0, %v840
        %v842 = vpop.f32.mrb[0].mxu0
        %v843 = vadd.f32 0.0, %v842
        %844 = vmatprep.mubr.bf16.mxu0 0
        %845 = vmatmul.mubr.bf16.gmra.mrb[0].mxu0 %v681
        %v846 = vpop.f32.mrb[0].mxu0
        %v847 = vadd.f32 0.0, %v846
        %v848 = vpop.f32.mrb[0].mxu0
        %v849 = vadd.f32 0.0, %v848
        %v850 = vpop.f32.mrb[0].mxu0
        %v851 = vadd.f32 0.0, %v850
        %v852 = vpop.f32.mrb[0].mxu0
        %v853 = vadd.f32 0.0, %v852
        %854 = vmatprep.mubr.bf16.mxu0 0
        %855 = vmatmul.mubr.bf16.gmra.mrb[0].mxu0 %v684
        %v856 = vpop.f32.mrb[0].mxu0
        %v857 = vadd.f32 0.0, %v856
        %v858 = vpop.f32.mrb[0].mxu0
        %v859 = vadd.f32 0.0, %v858
        %v860 = vpop.f32.mrb[0].mxu0
        %v861 = vadd.f32 0.0, %v860
        %v862 = vpop.f32.mrb[0].mxu0
        %v863 = vadd.f32 0.0, %v862
        %864 = vmatprep.mubr.bf16.mxu0 0
        %865 = vmatmul.mubr.bf16.gmra.mrb[0].mxu0 %v687
        %v866 = vpop.f32.mrb[0].mxu0
        %v867 = vadd.f32 0.0, %v866
        %v868 = vpop.f32.mrb[0].mxu0
        %v869 = vadd.f32 0.0, %v868
        %v870 = vpop.f32.mrb[0].mxu0
        %v871 = vadd.f32 0.0, %v870
        %v872 = vpop.f32.mrb[0].mxu0
        %v873 = vadd.f32 0.0, %v872
        %874 = vmatprep.mubr.bf16.mxu0 0
        %875 = vmatmul.mubr.bf16.gmra.mrb[0].mxu0 %v690
        %v876 = vpop.f32.mrb[0].mxu0
        %v877 = vadd.f32 0.0, %v876
        %v878 = vpop.f32.mrb[0].mxu0
        %v879 = vadd.f32 0.0, %v878
        %v880 = vpop.f32.mrb[0].mxu0
        %v881 = vadd.f32 0.0, %v880
        %v882 = vpop.f32.mrb[0].mxu0
        %v883 = vadd.f32 0.0, %v882
        %884 = vmatprep.mubr.bf16.mxu0 0
        %885 = vmatmul.mubr.bf16.gmra.mrb[0].mxu0 %v693
        %v886 = vpop.f32.mrb[0].mxu0
        %v887 = vadd.f32 0.0, %v886
        %v888 = vpop.f32.mrb[0].mxu0
        %v889 = vadd.f32 0.0, %v888
        %v890 = vpop.f32.mrb[0].mxu0
        %v891 = vadd.f32 0.0, %v890
        %v892 = vpop.f32.mrb[0].mxu0
        %v893 = vadd.f32 0.0, %v892
        %894 = vdwg.mxu0
        %v895 = vmax.f32 %v737, %v739
        %896 = vmax.xlane.f32.xlu0 %v895
        %v897 = vpop.xlane.xlu0 %896
        %v898 = vmax.f32 %v741, %v743
        %899 = vmax.xlane.f32.xlu0 %v898
        %v900 = vpop.xlane.xlu0 %899
        %v901 = vmax.f32 %v747, %v749
        %902 = vmax.xlane.f32.xlu0 %v901
        %v903 = vpop.xlane.xlu0 %902
        %v904 = vmax.f32 %v751, %v753
        %905 = vmax.xlane.f32.xlu0 %v904
        %v906 = vpop.xlane.xlu0 %905
        %v907 = vmax.f32 %v757, %v759
        %908 = vmax.xlane.f32.xlu0 %v907
        %v909 = vpop.xlane.xlu0 %908
        %v910 = vmax.f32 %v761, %v763
        %911 = vmax.xlane.f32.xlu0 %v910
        %v912 = vpop.xlane.xlu0 %911
        %v913 = vmax.f32 %v767, %v769
        %914 = vmax.xlane.f32.xlu0 %v913
        %v915 = vpop.xlane.xlu0 %914
        %v916 = vmax.f32 %v771, %v773
        %917 = vmax.xlane.f32.xlu0 %v916
        %v918 = vpop.xlane.xlu0 %917
        %v919 = vmax.f32 %v777, %v779
        %920 = vmax.xlane.f32.xlu0 %v919
        %v921 = vpop.xlane.xlu0 %920
        %v922 = vmax.f32 %v781, %v783
        %923 = vmax.xlane.f32.xlu0 %v922
        %v924 = vpop.xlane.xlu0 %923
        %v925 = vmax.f32 %v787, %v789
        %926 = vmax.xlane.f32.xlu0 %v925
        %v927 = vpop.xlane.xlu0 %926
        %v928 = vmax.f32 %v791, %v793
        %929 = vmax.xlane.f32.xlu0 %v928
        %v930 = vpop.xlane.xlu0 %929
        %v931 = vmax.f32 %v797, %v799
        %932 = vmax.xlane.f32.xlu0 %v931
        %v933 = vpop.xlane.xlu0 %932
        %v934 = vmax.f32 %v801, %v803
        %935 = vmax.xlane.f32.xlu0 %v934
        %v936 = vpop.xlane.xlu0 %935
        %v937 = vmax.f32 %v807, %v809
        %938 = vmax.xlane.f32.xlu0 %v937
        %v939 = vpop.xlane.xlu0 %938
        %v940 = vmax.f32 %v811, %v813
        %941 = vmax.xlane.f32.xlu0 %v940
        %v942 = vpop.xlane.xlu0 %941
        %v943 = vmax.f32 %v817, %v819
        %944 = vmax.xlane.f32.xlu0 %v943
        %v945 = vpop.xlane.xlu0 %944
        %v946 = vmax.f32 %v821, %v823
        %947 = vmax.xlane.f32.xlu0 %v946
        %v948 = vpop.xlane.xlu0 %947
        %v949 = vmax.f32 %v827, %v829
        %950 = vmax.xlane.f32.xlu0 %v949
        %v951 = vpop.xlane.xlu0 %950
        %v952 = vmax.f32 %v831, %v833
        %953 = vmax.xlane.f32.xlu0 %v952
        %v954 = vpop.xlane.xlu0 %953
        %v955 = vmax.f32 %v837, %v839
        %956 = vmax.xlane.f32.xlu0 %v955
        %v957 = vpop.xlane.xlu0 %956
        %v958 = vmax.f32 %v841, %v843
        %959 = vmax.xlane.f32.xlu0 %v958
        %v960 = vpop.xlane.xlu0 %959
        %v961 = vmax.f32 %v847, %v849
        %962 = vmax.xlane.f32.xlu0 %v961
        %v963 = vpop.xlane.xlu0 %962
        %v964 = vmax.f32 %v851, %v853
        %965 = vmax.xlane.f32.xlu0 %v964
        %v966 = vpop.xlane.xlu0 %965
        %v967 = vmax.f32 %v857, %v859
        %968 = vmax.xlane.f32.xlu0 %v967
        %v969 = vpop.xlane.xlu0 %968
        %v970 = vmax.f32 %v861, %v863
        %971 = vmax.xlane.f32.xlu0 %v970
        %v972 = vpop.xlane.xlu0 %971
        %v973 = vmax.f32 %v867, %v869
        %974 = vmax.xlane.f32.xlu0 %v973
        %v975 = vpop.xlane.xlu0 %974
        %v976 = vmax.f32 %v871, %v873
        %977 = vmax.xlane.f32.xlu0 %v976
        %v978 = vpop.xlane.xlu0 %977
        %v979 = vmax.f32 %v877, %v879
        %980 = vmax.xlane.f32.xlu0 %v979
        %v981 = vpop.xlane.xlu0 %980
        %v982 = vmax.f32 %v881, %v883
        %983 = vmax.xlane.f32.xlu0 %v982
        %v984 = vpop.xlane.xlu0 %983
        %v985 = vmax.f32 %v887, %v889
        %986 = vmax.xlane.f32.xlu0 %v985
        %v987 = vpop.xlane.xlu0 %986
        %v988 = vmax.f32 %v891, %v893
        %989 = vmax.xlane.f32.xlu0 %v988
        %v990 = vpop.xlane.xlu0 %989
        %v991 = vsub.f32 %v737, %v897
        %v992 = vsub.f32 %v739, %v897
        %v993 = vsub.f32 %v741, %v900
        %v994 = vsub.f32 %v743, %v900
        %v995 = vsub.f32 %v747, %v903
        %v996 = vsub.f32 %v749, %v903
        %v997 = vsub.f32 %v751, %v906
        %v998 = vsub.f32 %v753, %v906
        %v999 = vsub.f32 %v757, %v909
        %v1000 = vsub.f32 %v759, %v909
        %v1001 = vsub.f32 %v761, %v912
        %v1002 = vsub.f32 %v763, %v912
        %v1003 = vsub.f32 %v767, %v915
        %v1004 = vsub.f32 %v769, %v915
        %v1005 = vsub.f32 %v771, %v918
        %v1006 = vsub.f32 %v773, %v918
        %v1007 = vsub.f32 %v777, %v921
        %v1008 = vsub.f32 %v779, %v921
        %v1009 = vsub.f32 %v781, %v924
        %v1010 = vsub.f32 %v783, %v924
        %v1011 = vsub.f32 %v787, %v927
        %v1012 = vsub.f32 %v789, %v927
        %v1013 = vsub.f32 %v791, %v930
        %v1014 = vsub.f32 %v793, %v930
        %v1015 = vsub.f32 %v797, %v933
        %v1016 = vsub.f32 %v799, %v933
        %v1017 = vsub.f32 %v801, %v936
        %v1018 = vsub.f32 %v803, %v936
        %v1019 = vsub.f32 %v807, %v939
        %v1020 = vsub.f32 %v809, %v939
        %v1021 = vsub.f32 %v811, %v942
        %v1022 = vsub.f32 %v813, %v942
        %v1023 = vsub.f32 %v817, %v945
        %v1024 = vsub.f32 %v819, %v945
        %v1025 = vsub.f32 %v821, %v948
        %v1026 = vsub.f32 %v823, %v948
        %v1027 = vsub.f32 %v827, %v951
        %v1028 = vsub.f32 %v829, %v951
        %v1029 = vsub.f32 %v831, %v954
        %v1030 = vsub.f32 %v833, %v954
        %v1031 = vsub.f32 %v837, %v957
        %v1032 = vsub.f32 %v839, %v957
        %v1033 = vsub.f32 %v841, %v960
        %v1034 = vsub.f32 %v843, %v960
        %v1035 = vsub.f32 %v847, %v963
        %v1036 = vsub.f32 %v849, %v963
        %v1037 = vsub.f32 %v851, %v966
        %v1038 = vsub.f32 %v853, %v966
        %v1039 = vsub.f32 %v857, %v969
        %v1040 = vsub.f32 %v859, %v969
        %v1041 = vsub.f32 %v861, %v972
        %v1042 = vsub.f32 %v863, %v972
        %v1043 = vsub.f32 %v867, %v975
        %v1044 = vsub.f32 %v869, %v975
        %v1045 = vsub.f32 %v871, %v978
        %v1046 = vsub.f32 %v873, %v978
        %v1047 = vsub.f32 %v877, %v981
        %v1048 = vsub.f32 %v879, %v981
        %v1049 = vsub.f32 %v881, %v984
        %v1050 = vsub.f32 %v883, %v984
        %v1051 = vsub.f32 %v887, %v987
        %v1052 = vsub.f32 %v889, %v987
        %v1053 = vsub.f32 %v891, %v990
        %v1054 = vsub.f32 %v893, %v990
        %v1055 = vmul.f32 %v991, 1.442695
        %v1056 = vpow.pop %v1055
        %v1057 = vmul.f32 %v992, 1.442695
        %v1058 = vpow.pop %v1057
        %v1059 = vmul.f32 %v993, 1.442695
        %v1060 = vpow.pop %v1059
        %v1061 = vmul.f32 %v994, 1.442695
        %v1062 = vpow.pop %v1061
        %v1063 = vmul.f32 %v995, 1.442695
        %v1064 = vpow.pop %v1063
        %v1065 = vmul.f32 %v996, 1.442695
        %v1066 = vpow.pop %v1065
        %v1067 = vmul.f32 %v997, 1.442695
        %v1068 = vpow.pop %v1067
        %v1069 = vmul.f32 %v998, 1.442695
        %v1070 = vpow.pop %v1069
        %v1071 = vmul.f32 %v999, 1.442695
        %v1072 = vpow.pop %v1071
        %v1073 = vmul.f32 %v1000, 1.442695
        %v1074 = vpow.pop %v1073
        %v1075 = vmul.f32 %v1001, 1.442695
        %v1076 = vpow.pop %v1075
        %v1077 = vmul.f32 %v1002, 1.442695
        %v1078 = vpow.pop %v1077
        %v1079 = vmul.f32 %v1003, 1.442695
        %v1080 = vpow.pop %v1079
        %v1081 = vmul.f32 %v1004, 1.442695
        %v1082 = vpow.pop %v1081
        %v1083 = vmul.f32 %v1005, 1.442695
        %v1084 = vpow.pop %v1083
        %v1085 = vmul.f32 %v1006, 1.442695
        %v1086 = vpow.pop %v1085
        %v1087 = vmul.f32 %v1007, 1.442695
        %v1088 = vpow.pop %v1087
        %v1089 = vmul.f32 %v1008, 1.442695
        %v1090 = vpow.pop %v1089
        %v1091 = vmul.f32 %v1009, 1.442695
        %v1092 = vpow.pop %v1091
        %v1093 = vmul.f32 %v1010, 1.442695
        %v1094 = vpow.pop %v1093
        %v1095 = vmul.f32 %v1011, 1.442695
        %v1096 = vpow.pop %v1095
        %v1097 = vmul.f32 %v1012, 1.442695
        %v1098 = vpow.pop %v1097
        %v1099 = vmul.f32 %v1013, 1.442695
        %v1100 = vpow.pop %v1099
        %v1101 = vmul.f32 %v1014, 1.442695
        %v1102 = vpow.pop %v1101
        %v1103 = vmul.f32 %v1015, 1.442695
        %v1104 = vpow.pop %v1103
        %v1105 = vmul.f32 %v1016, 1.442695
        %v1106 = vpow.pop %v1105
        %v1107 = vmul.f32 %v1017, 1.442695
        %v1108 = vpow.pop %v1107
        %v1109 = vmul.f32 %v1018, 1.442695
        %v1110 = vpow.pop %v1109
        %v1111 = vmul.f32 %v1019, 1.442695
        %v1112 = vpow.pop %v1111
        %v1113 = vmul.f32 %v1020, 1.442695
        %v1114 = vpow.pop %v1113
        %v1115 = vmul.f32 %v1021, 1.442695
        %v1116 = vpow.pop %v1115
        %v1117 = vmul.f32 %v1022, 1.442695
        %v1118 = vpow.pop %v1117
        %v1119 = vmul.f32 %v1023, 1.442695
        %v1120 = vpow.pop %v1119
        %v1121 = vmul.f32 %v1024, 1.442695
        %v1122 = vpow.pop %v1121
        %v1123 = vmul.f32 %v1025, 1.442695
        %v1124 = vpow.pop %v1123
        %v1125 = vmul.f32 %v1026, 1.442695
        %v1126 = vpow.pop %v1125
        %v1127 = vmul.f32 %v1027, 1.442695
        %v1128 = vpow.pop %v1127
        %v1129 = vmul.f32 %v1028, 1.442695
        %v1130 = vpow.pop %v1129
        %v1131 = vmul.f32 %v1029, 1.442695
        %v1132 = vpow.pop %v1131
        %v1133 = vmul.f32 %v1030, 1.442695
        %v1134 = vpow.pop %v1133
        %v1135 = vmul.f32 %v1031, 1.442695
        %v1136 = vpow.pop %v1135
        %v1137 = vmul.f32 %v1032, 1.442695
        %v1138 = vpow.pop %v1137
        %v1139 = vmul.f32 %v1033, 1.442695
        %v1140 = vpow.pop %v1139
        %v1141 = vmul.f32 %v1034, 1.442695
        %v1142 = vpow.pop %v1141
        %v1143 = vmul.f32 %v1035, 1.442695
        %v1144 = vpow.pop %v1143
        %v1145 = vmul.f32 %v1036, 1.442695
        %v1146 = vpow.pop %v1145
        %v1147 = vmul.f32 %v1037, 1.442695
        %v1148 = vpow.pop %v1147
        %v1149 = vmul.f32 %v1038, 1.442695
        %v1150 = vpow.pop %v1149
        %v1151 = vmul.f32 %v1039, 1.442695
        %v1152 = vpow.pop %v1151
        %v1153 = vmul.f32 %v1040, 1.442695
        %v1154 = vpow.pop %v1153
        %v1155 = vmul.f32 %v1041, 1.442695
        %v1156 = vpow.pop %v1155
        %v1157 = vmul.f32 %v1042, 1.442695
        %v1158 = vpow.pop %v1157
        %v1159 = vmul.f32 %v1043, 1.442695
        %v1160 = vpow.pop %v1159
        %v1161 = vmul.f32 %v1044, 1.442695
        %v1162 = vpow.pop %v1161
        %v1163 = vmul.f32 %v1045, 1.442695
        %v1164 = vpow.pop %v1163
        %v1165 = vmul.f32 %v1046, 1.442695
        %v1166 = vpow.pop %v1165
        %v1167 = vmul.f32 %v1047, 1.442695
        %v1168 = vpow.pop %v1167
        %v1169 = vmul.f32 %v1048, 1.442695
        %v1170 = vpow.pop %v1169
        %v1171 = vmul.f32 %v1049, 1.442695
        %v1172 = vpow.pop %v1171
        %v1173 = vmul.f32 %v1050, 1.442695
        %v1174 = vpow.pop %v1173
        %v1175 = vmul.f32 %v1051, 1.442695
        %v1176 = vpow.pop %v1175
        %v1177 = vmul.f32 %v1052, 1.442695
        %v1178 = vpow.pop %v1177
        %v1179 = vmul.f32 %v1053, 1.442695
        %v1180 = vpow.pop %v1179
        %v1181 = vmul.f32 %v1054, 1.442695
        %v1182 = vpow.pop %v1181
        %v1183 = vadd.f32 %v1056, %v1058
        %1184 = vadd.xlane.f32.xlu0 %v1183
        %v1185 = vpop.xlane.xlu0 %1184
        %v1186 = vadd.f32 %v1060, %v1062
        %1187 = vadd.xlane.f32.xlu0 %v1186
        %v1188 = vpop.xlane.xlu0 %1187
        %v1189 = vadd.f32 %v1064, %v1066
        %1190 = vadd.xlane.f32.xlu0 %v1189
        %v1191 = vpop.xlane.xlu0 %1190
        %v1192 = vadd.f32 %v1068, %v1070
        %1193 = vadd.xlane.f32.xlu0 %v1192
        %v1194 = vpop.xlane.xlu0 %1193
        %v1195 = vadd.f32 %v1072, %v1074
        %1196 = vadd.xlane.f32.xlu0 %v1195
        %v1197 = vpop.xlane.xlu0 %1196
        %v1198 = vadd.f32 %v1076, %v1078
        %1199 = vadd.xlane.f32.xlu0 %v1198
        %v1200 = vpop.xlane.xlu0 %1199
        %v1201 = vadd.f32 %v1080, %v1082
        %1202 = vadd.xlane.f32.xlu0 %v1201
        %v1203 = vpop.xlane.xlu0 %1202
        %v1204 = vadd.f32 %v1084, %v1086
        %1205 = vadd.xlane.f32.xlu0 %v1204
        %v1206 = vpop.xlane.xlu0 %1205
        %v1207 = vadd.f32 %v1088, %v1090
        %1208 = vadd.xlane.f32.xlu0 %v1207
        %v1209 = vpop.xlane.xlu0 %1208
        %v1210 = vadd.f32 %v1092, %v1094
        %1211 = vadd.xlane.f32.xlu0 %v1210
        %v1212 = vpop.xlane.xlu0 %1211
        %v1213 = vadd.f32 %v1096, %v1098
        %1214 = vadd.xlane.f32.xlu0 %v1213
        %v1215 = vpop.xlane.xlu0 %1214
        %v1216 = vadd.f32 %v1100, %v1102
        %1217 = vadd.xlane.f32.xlu0 %v1216
        %v1218 = vpop.xlane.xlu0 %1217
        %v1219 = vadd.f32 %v1104, %v1106
        %1220 = vadd.xlane.f32.xlu0 %v1219
        %v1221 = vpop.xlane.xlu0 %1220
        %v1222 = vadd.f32 %v1108, %v1110
        %1223 = vadd.xlane.f32.xlu0 %v1222
        %v1224 = vpop.xlane.xlu0 %1223
        %v1225 = vadd.f32 %v1112, %v1114
        %1226 = vadd.xlane.f32.xlu0 %v1225
        %v1227 = vpop.xlane.xlu0 %1226
        %v1228 = vadd.f32 %v1116, %v1118
        %1229 = vadd.xlane.f32.xlu0 %v1228
        %v1230 = vpop.xlane.xlu0 %1229
        %v1231 = vadd.f32 %v1120, %v1122
        %1232 = vadd.xlane.f32.xlu0 %v1231
        %v1233 = vpop.xlane.xlu0 %1232
        %v1234 = vadd.f32 %v1124, %v1126
        %1235 = vadd.xlane.f32.xlu0 %v1234
        %v1236 = vpop.xlane.xlu0 %1235
        %v1237 = vadd.f32 %v1128, %v1130
        %1238 = vadd.xlane.f32.xlu0 %v1237
        %v1239 = vpop.xlane.xlu0 %1238
        %v1240 = vadd.f32 %v1132, %v1134
        %1241 = vadd.xlane.f32.xlu0 %v1240
        %v1242 = vpop.xlane.xlu0 %1241
        %v1243 = vadd.f32 %v1136, %v1138
        %1244 = vadd.xlane.f32.xlu0 %v1243
        %v1245 = vpop.xlane.xlu0 %1244
        %v1246 = vadd.f32 %v1140, %v1142
        %1247 = vadd.xlane.f32.xlu0 %v1246
        %v1248 = vpop.xlane.xlu0 %1247
        %v1249 = vadd.f32 %v1144, %v1146
        %1250 = vadd.xlane.f32.xlu0 %v1249
        %v1251 = vpop.xlane.xlu0 %1250
        %v1252 = vadd.f32 %v1148, %v1150
        %1253 = vadd.xlane.f32.xlu0 %v1252
        %v1254 = vpop.xlane.xlu0 %1253
        %v1255 = vadd.f32 %v1152, %v1154
        %1256 = vadd.xlane.f32.xlu0 %v1255
        %v1257 = vpop.xlane.xlu0 %1256
        %v1258 = vadd.f32 %v1156, %v1158
        %1259 = vadd.xlane.f32.xlu0 %v1258
        %v1260 = vpop.xlane.xlu0 %1259
        %v1261 = vadd.f32 %v1160, %v1162
        %1262 = vadd.xlane.f32.xlu0 %v1261
        %v1263 = vpop.xlane.xlu0 %1262
        %v1264 = vadd.f32 %v1164, %v1166
        %1265 = vadd.xlane.f32.xlu0 %v1264
        %v1266 = vpop.xlane.xlu0 %1265
        %v1267 = vadd.f32 %v1168, %v1170
        %1268 = vadd.xlane.f32.xlu0 %v1267
        %v1269 = vpop.xlane.xlu0 %1268
        %v1270 = vadd.f32 %v1172, %v1174
        %1271 = vadd.xlane.f32.xlu0 %v1270
        %v1272 = vpop.xlane.xlu0 %1271
        %v1273 = vadd.f32 %v1176, %v1178
        %1274 = vadd.xlane.f32.xlu0 %v1273
        %v1275 = vpop.xlane.xlu0 %1274
        %v1276 = vadd.f32 %v1180, %v1182
        %1277 = vadd.xlane.f32.xlu0 %v1276
        %v1278 = vpop.xlane.xlu0 %1277
        %v1279 = vrcp.pop %v1185
        %v1280 = vrcp.pop %v1188
        %v1281 = vrcp.pop %v1191
        %v1282 = vrcp.pop %v1194
        %v1283 = vrcp.pop %v1197
        %v1284 = vrcp.pop %v1200
        %v1285 = vrcp.pop %v1203
        %v1286 = vrcp.pop %v1206
        %v1287 = vrcp.pop %v1209
        %v1288 = vrcp.pop %v1212
        %v1289 = vrcp.pop %v1215
        %v1290 = vrcp.pop %v1218
        %v1291 = vrcp.pop %v1221
        %v1292 = vrcp.pop %v1224
        %v1293 = vrcp.pop %v1227
        %v1294 = vrcp.pop %v1230
        %v1295 = vrcp.pop %v1233
        %v1296 = vrcp.pop %v1236
        %v1297 = vrcp.pop %v1239
        %v1298 = vrcp.pop %v1242
        %v1299 = vrcp.pop %v1245
        %v1300 = vrcp.pop %v1248
        %v1301 = vrcp.pop %v1251
        %v1302 = vrcp.pop %v1254
        %v1303 = vrcp.pop %v1257
        %v1304 = vrcp.pop %v1260
        %v1305 = vrcp.pop %v1263
        %v1306 = vrcp.pop %v1266
        %v1307 = vrcp.pop %v1269
        %v1308 = vrcp.pop %v1272
        %v1309 = vrcp.pop %v1275
        %v1310 = vrcp.pop %v1278
        %v1311 = vmul.f32 %v1056, %v1279
        %v1312 = vmul.f32 %v1058, %v1279
        %v1313 = vmul.f32 %v1060, %v1280
        %v1314 = vmul.f32 %v1062, %v1280
        %v1315 = vmul.f32 %v1064, %v1281
        %v1316 = vmul.f32 %v1066, %v1281
        %v1317 = vmul.f32 %v1068, %v1282
        %v1318 = vmul.f32 %v1070, %v1282
        %v1319 = vmul.f32 %v1072, %v1283
        %v1320 = vmul.f32 %v1074, %v1283
        %v1321 = vmul.f32 %v1076, %v1284
        %v1322 = vmul.f32 %v1078, %v1284
        %v1323 = vmul.f32 %v1080, %v1285
        %v1324 = vmul.f32 %v1082, %v1285
        %v1325 = vmul.f32 %v1084, %v1286
        %v1326 = vmul.f32 %v1086, %v1286
        %v1327 = vmul.f32 %v1088, %v1287
        %v1328 = vmul.f32 %v1090, %v1287
        %v1329 = vmul.f32 %v1092, %v1288
        %v1330 = vmul.f32 %v1094, %v1288
        %v1331 = vmul.f32 %v1096, %v1289
        %v1332 = vmul.f32 %v1098, %v1289
        %v1333 = vmul.f32 %v1100, %v1290
        %v1334 = vmul.f32 %v1102, %v1290
        %v1335 = vmul.f32 %v1104, %v1291
        %v1336 = vmul.f32 %v1106, %v1291
        %v1337 = vmul.f32 %v1108, %v1292
        %v1338 = vmul.f32 %v1110, %v1292
        %v1339 = vmul.f32 %v1112, %v1293
        %v1340 = vmul.f32 %v1114, %v1293
        %v1341 = vmul.f32 %v1116, %v1294
        %v1342 = vmul.f32 %v1118, %v1294
        %v1343 = vmul.f32 %v1120, %v1295
        %v1344 = vmul.f32 %v1122, %v1295
        %v1345 = vmul.f32 %v1124, %v1296
        %v1346 = vmul.f32 %v1126, %v1296
        %v1347 = vmul.f32 %v1128, %v1297
        %v1348 = vmul.f32 %v1130, %v1297
        %v1349 = vmul.f32 %v1132, %v1298
        %v1350 = vmul.f32 %v1134, %v1298
        %v1351 = vmul.f32 %v1136, %v1299
        %v1352 = vmul.f32 %v1138, %v1299
        %v1353 = vmul.f32 %v1140, %v1300
        %v1354 = vmul.f32 %v1142, %v1300
        %v1355 = vmul.f32 %v1144, %v1301
        %v1356 = vmul.f32 %v1146, %v1301
        %v1357 = vmul.f32 %v1148, %v1302
        %v1358 = vmul.f32 %v1150, %v1302
        %v1359 = vmul.f32 %v1152, %v1303
        %v1360 = vmul.f32 %v1154, %v1303
        %v1361 = vmul.f32 %v1156, %v1304
        %v1362 = vmul.f32 %v1158, %v1304
        %v1363 = vmul.f32 %v1160, %v1305
        %v1364 = vmul.f32 %v1162, %v1305
        %v1365 = vmul.f32 %v1164, %v1306
        %v1366 = vmul.f32 %v1166, %v1306
        %v1367 = vmul.f32 %v1168, %v1307
        %v1368 = vmul.f32 %v1170, %v1307
        %v1369 = vmul.f32 %v1172, %v1308
        %v1370 = vmul.f32 %v1174, %v1308
        %v1371 = vmul.f32 %v1176, %v1309
        %v1372 = vmul.f32 %v1178, %v1309
        %v1373 = vmul.f32 %v1180, %v1310
        %v1374 = vmul.f32 %v1182, %v1310
        %v1375 = vpack.c.bf16 %v1313, %v1311
        %v1376 = vpack.c.bf16 %v1314, %v1312
        %v1377 = vpack.c.bf16 %v1317, %v1315
        %v1378 = vpack.c.bf16 %v1318, %v1316
        %v1379 = vpack.c.bf16 %v1321, %v1319
        %v1380 = vpack.c.bf16 %v1322, %v1320
        %v1381 = vpack.c.bf16 %v1325, %v1323
        %v1382 = vpack.c.bf16 %v1326, %v1324
        %v1383 = vpack.c.bf16 %v1329, %v1327
        %v1384 = vpack.c.bf16 %v1330, %v1328
        %v1385 = vpack.c.bf16 %v1333, %v1331
        %v1386 = vpack.c.bf16 %v1334, %v1332
        %v1387 = vpack.c.bf16 %v1337, %v1335
        %v1388 = vpack.c.bf16 %v1338, %v1336
        %v1389 = vpack.c.bf16 %v1341, %v1339
        %v1390 = vpack.c.bf16 %v1342, %v1340
        %v1391 = vpack.c.bf16 %v1345, %v1343
        %v1392 = vpack.c.bf16 %v1346, %v1344
        %v1393 = vpack.c.bf16 %v1349, %v1347
        %v1394 = vpack.c.bf16 %v1350, %v1348
        %v1395 = vpack.c.bf16 %v1353, %v1351
        %v1396 = vpack.c.bf16 %v1354, %v1352
        %v1397 = vpack.c.bf16 %v1357, %v1355
        %v1398 = vpack.c.bf16 %v1358, %v1356
        %v1399 = vpack.c.bf16 %v1361, %v1359
        %v1400 = vpack.c.bf16 %v1362, %v1360
        %v1401 = vpack.c.bf16 %v1365, %v1363
        %v1402 = vpack.c.bf16 %v1366, %v1364
        %v1403 = vpack.c.bf16 %v1369, %v1367
        %v1404 = vpack.c.bf16 %v1370, %v1368
        %v1405 = vpack.c.bf16 %v1373, %v1371
        %v1406 = vpack.c.bf16 %v1374, %v1372
        %v1407 = vld [vmem:[%s269] sm:$0xff]
        %v1408 = vld [vmem:[%s269 + $0x8] sm:$0xff]
        %v1409 = vld [vmem:[%s269 + $0x10] sm:$0xff]
        %v1410 = vld [vmem:[%s269 + $0x18] sm:$0xff]
        %v1411 = vld [vmem:[%s269 + $0x20] sm:$0xff]
        %v1412 = vld [vmem:[%s269 + $0x28] sm:$0xff]
        %v1413 = vld [vmem:[%s269 + $0x30] sm:$0xff]
        %v1414 = vld [vmem:[%s269 + $0x38] sm:$0xff]
        %1415 = vmatprep.subr.bf16.mxu0 %v1376
        %1416 = vmatpush1.bf16.xpose.msra.mxu0 %v1375
        %1417 = vmatprep.subr.bf16.mxu0 %v1378
        %1418 = vmatpush1.bf16.xpose.msra.mxu0 %v1377
        %1419 = vmatprep.subr.bf16.mxu0 %v1380
        %1420 = vmatpush1.bf16.xpose.msra.mxu0 %v1379
        %1421 = vmatprep.subr.bf16.mxu0 %v1382
        %1422 = vmatpush1.bf16.xpose.msra.mxu0 %v1381
        %1423 = vmatprep.subr.bf16.mxu0 %v1384
        %1424 = vmatpush1.bf16.xpose.msra.mxu0 %v1383
        %1425 = vmatprep.subr.bf16.mxu0 %v1386
        %1426 = vmatpush1.bf16.xpose.msra.mxu0 %v1385
        %1427 = vmatprep.subr.bf16.mxu0 %v1388
        %1428 = vmatpush1.bf16.xpose.msra.mxu0 %v1387
        %1429 = vmatprep.subr.bf16.mxu0 %v1390
        %1430 = vmatpush1.bf16.xpose.msra.mxu0 %v1389
        %1431 = vmatprep.subr.bf16.mxu0 %v1392
        %1432 = vmatpush1.bf16.xpose.msra.mxu0 %v1391
        %1433 = vmatprep.subr.bf16.mxu0 %v1394
        %1434 = vmatpush1.bf16.xpose.msra.mxu0 %v1393
        %1435 = vmatprep.subr.bf16.mxu0 %v1396
        %1436 = vmatpush1.bf16.xpose.msra.mxu0 %v1395
        %1437 = vmatprep.subr.bf16.mxu0 %v1398
        %1438 = vmatpush1.bf16.xpose.msra.mxu0 %v1397
        %1439 = vmatprep.subr.bf16.mxu0 %v1400
        %1440 = vmatpush1.bf16.xpose.msra.mxu0 %v1399
        %1441 = vmatprep.subr.bf16.mxu0 %v1402
        %1442 = vmatpush1.bf16.xpose.msra.mxu0 %v1401
        %1443 = vmatprep.subr.bf16.mxu0 %v1404
        %1444 = vmatpush1.bf16.xpose.msra.mxu0 %v1403
        %1445 = vmatprep.subr.bf16.mxu0 %v1406
        %1446 = vmatpush1.bf16.xpose.msra.mxu0 %v1405
        %1447 = vmatprep.mubr.bf16.mxu0 %v480
        %1448 = vmatmul.mubr.bf16.gmra.mrb[0].mxu0 %v479
        %v1449 = vpop.f32.mrb[0].mxu0
        %v1450 = vadd.f32 %v1407, %v1449
        %v1451 = vpop.f32.mrb[0].mxu0
        %v1452 = vadd.f32 %v1408, %v1451
        %v1453 = vpop.f32.mrb[0].mxu0
        %v1454 = vadd.f32 %v1409, %v1453
        %v1455 = vpop.f32.mrb[0].mxu0
        %v1456 = vadd.f32 %v1410, %v1455
        %1457 = vmatprep.mubr.bf16.mxu0 %v482
        %1458 = vmatmul.mubr.bf16.gmra.mrb[0].mxu0 %v481
        %v1459 = vpop.f32.mrb[0].mxu0
        %v1460 = vadd.f32 %v1411, %v1459
        %v1461 = vpop.f32.mrb[0].mxu0
        %v1462 = vadd.f32 %v1412, %v1461
        %v1463 = vpop.f32.mrb[0].mxu0
        %v1464 = vadd.f32 %v1413, %v1463
        %v1465 = vpop.f32.mrb[0].mxu0
        %v1466 = vadd.f32 %v1414, %v1465
        %1467 = vdwg.mxu0
        %1468 = vst [vmem:[%s302] sm:$0xff] %v1450
        %1469 = vst [vmem:[%s302 + $0x8] sm:$0xff] %v1452
        %1470 = vst [vmem:[%s302 + $0x10] sm:$0xff] %v1454
        %1471 = vst [vmem:[%s302 + $0x18] sm:$0xff] %v1456
        %1472 = vst [vmem:[%s302 + $0x20] sm:$0xff] %v1460
        %1473 = vst [vmem:[%s302 + $0x28] sm:$0xff] %v1462
        %1474 = vst [vmem:[%s302 + $0x30] sm:$0xff] %v1464
        %1475 = vst [vmem:[%s302 + $0x38] sm:$0xff] %v1466
        %s1476 = sand.u32 %s183, 1
        %s1477 = scalar_lea.sflag [#allocation6], %s1476
        %s1478 = sand.u32 %s183, 1
        %s1479 = smul.addr %s1478, 64
        %s1480 = scalar_lea.vmem [#allocation7], %s1479
        // Predicated region
        $region53: #{tpu_custom_call.1} parent=43 // pred_check
          %p1481 = pneg %p193
        $region54: #{tpu_custom_call.1} parent=43 // pred_check_branch
          %1483 = sbr.rel (%p1481) target = $region56
        $region55: #{tpu_custom_call.1} parent=43 // pred_region
          %s1484 = smul.u32 2, %s28
          %s1486 = ssub.s32 1024, 1024
          %1487 = vsyncadd %s1477, %s1486
          %s1488 = smul.addr %s27, 8
          %s1489 = sadd.s32 %s1484, %s1488
          %s1490 = smul.addr %s1489, 128
          %s1491 = scalar_lea.hbm %s6, %s1490
          %s1492 = sshll.u32 %s1480, 4
          %s1493 = int_to_ptr.vmem [resolvable:$true] %s1492
          %1498 = dma.vmem_to_hbm [thread:$0]  %s1493, 1024, %s1491, %s1477, 256, 256, 16
        $region56: #{tpu_custom_call.1} parent=43 // pred_fallthru
          _
      $region44: #{tpu_custom_call.1} parent=5 // pred_fallthru
        _
      %p1499 = scmp.le.s32.totalorder 2, %s18
      // Predicated region
      $region57: #{tpu_custom_call.1} parent=5 // pred_check
        %p1500 = pneg %p1499
      $region58: #{tpu_custom_call.1} parent=5 // pred_check_branch
        %1502 = sbr.rel (%p1500) target = $region60
      $region59: #{tpu_custom_call.1} parent=5 // pred_region
        %s1503 = ssub.s32 %s18, 2
        // Predicated region
        $region61: #{tpu_custom_call.1} parent=59 // pred_check
          %p1504 = pneg %p199
        $region62: #{tpu_custom_call.1} parent=59 // pred_check_branch
          %1506 = sbr.rel (%p1504) target = $region64
        $region63: #{tpu_custom_call.1} parent=59 // pred_region
          %s1507 = sand.u32 %s184, 1
          %s1508 = scalar_lea.sflag [#allocation6], %s1507
          %s1509 = sand.u32 %s184, 1
          %s1510 = smul.addr %s1509, 64
          %s1511 = scalar_lea.vmem [#allocation7], %s1510
          %1512 = dma.done %s1508, 1024
        $region64: #{tpu_custom_call.1} parent=59 // pred_fallthru
          _
      $region60: #{tpu_custom_call.1} parent=5 // pred_fallthru
        _
    $region6: #{tpu_custom_call.1} parent=1 // loop_footer
      %s22 = sadd.s32 1, %s18
    $region7: #{tpu_custom_call.1} parent=1 // loop_footer_branch
      %17 = sbr.rel target = $region3
    $region8: #{tpu_custom_call.1} parent=1 // loop_exit
      _
    %1513 = vsyncpa [#allocation5], 1
    %s1514 = scalar_lea.sflag [#allocation5], 1
    %1515 = vsyncpa %s1514, 1
    %1516 = vsyncpa [#allocation6], 1
    %s1517 = scalar_lea.sflag [#allocation6], 1
    %1518 = vsyncpa %s1517, 1

</llo_original>
